<compile_context>
chip_gen: v6e
topology: v6e:2x2x1
jax: 0.10.0
libtpu: 0.0.40
codegen_flags: <defaults>
</compile_context>

<pallas_src>
import numpy as np
import jax
import jax.numpy as jnp
from jax.experimental import pallas as pl
from jax.experimental.pallas import tpu as pltpu

IMG_C = 3      # the gated branch always operates on 3-channel images
LANE = 128     # TPU lane width


def _round_up(v, m):
    return ((v + m - 1) // m) * m


def _bilinear_matrix(out_size, in_size):
    """Interpolation matrix for F.interpolate(..., 'bilinear', align_corners=True)."""
    m = np.zeros((out_size, in_size), dtype=np.float32)
    if out_size == 1:
        m[0, 0] = 1.0
        return m
    scale = (in_size - 1) / (out_size - 1)
    for o in range(out_size):
        src = o * scale
        i0 = min(int(np.floor(src)), in_size - 1)
        i1 = min(i0 + 1, in_size - 1)
        f = src - i0
        m[o, i0] += 1.0 - f
        m[o, i1] += f
    return m


# --------------------------------------------------------------------------
# Fused kernel: gated path + h path + combine, B batch elements per grid step
# --------------------------------------------------------------------------
def guided_attention_kernel(x_ref, px_ref, lh_ref, rwt_ref, s_ref,
                            gt_ref, mk_ref, emb_ref, wh_ref, shift_ref,
                            out_ref):
    # x_ref/px_ref : (B, 3*Hi, Wi) f32
    # lh_ref       : (3*Hb, 3*Hi)  f32  kw-major stacked left tap matrices
    # rwt_ref      : (3, Wi, We)   f32  per-kw right tap matrices (transposed)
    # s_ref        : (He, Hb)      f32  1x1-conv (w2) channel-sum selector
    # gt_ref       : (We, HWp)     f32  constant column-tiling matrix
    # mk_ref       : (He, HWp)     f32  constant row-selection mask
    # emb_ref      : (B, C, HWp)   f32  (lane-padded embedding)
    # wh_ref       : (C, C)        bf16 1x1 conv weight with BN scale folded in
    # shift_ref    : (C, 1)        f32  folded BatchNorm shift
    # out_ref      : (B, C, HWp)   f32
    B = emb_ref.shape[0]
    Hb = lh_ref.shape[0] // 3

    # grid-invariant operands, hoisted out of the per-batch loop
    lh = lh_ref[...]
    rw_taps = [rwt_ref[k] for k in range(3)]          # each (Wi, We)
    s_mat = s_ref[...]
    g_tile = gt_ref[...]
    m_mask = mk_ref[...]
    wh = wh_ref[...]
    shift = shift_ref[...]

    for b in range(B):                                 # static unroll
        # ---------------- gated path (all matmuls -> MXU) -----------------
        resid = jnp.abs(x_ref[b] - px_ref[b])                     # (3*Hi, Wi)
        t1 = jnp.dot(lh, resid,
                     preferred_element_type=jnp.float32)          # (3*Hb, Wi)
        # per-kw right multiply; slices land on sublane-tile boundaries
        acc = jnp.dot(t1[0:Hb, :], rw_taps[0],
                      preferred_element_type=jnp.float32)         # (Hb, We)
        for kw in range(1, 3):
            acc = acc + jnp.dot(t1[kw * Hb:(kw + 1) * Hb, :], rw_taps[kw],
                                preferred_element_type=jnp.float32)
        # ReLU then 1x1 conv (weighted channel sum) as one small matmul
        gate = jnp.dot(s_mat, jnp.maximum(acc, 0.0),
                       preferred_element_type=jnp.float32)        # (He, We)
        # exact sigmoid: exp on the EUP, one tiny f32 divide
        res = 1.0 / (1.0 + jnp.exp(-gate))                        # (He, We)
        # flatten (He, We) -> (1, HWp) row-major with constant matrices:
        # tile columns (MXU), mask the right row (VPU), reduce sublanes (XLU)
        res_row = jnp.sum(
            jnp.dot(res, g_tile, preferred_element_type=jnp.float32) * m_mask,
            axis=0, keepdims=True)                                # (1, HWp)

        # ---------------- h path: 1x1 conv + folded BN + ReLU --------------
        emb_b = emb_ref[b]                                        # (C, HWp) f32
        h_lin = jnp.dot(wh, emb_b.astype(jnp.bfloat16),
                        preferred_element_type=jnp.float32)       # (C, HWp)
        h_act = jnp.maximum(h_lin + shift, 0.0)
        # TODO(synk): training-mode Dropout (RNG mask) not implemented; eval-mode identity.
        out_ref[b] = res_row * h_act + emb_b                      # dense store


# --------------------------------------------------------------------------
# Wrapper
# --------------------------------------------------------------------------
def guided_attention_forward(x, pred_x, embedding, params, batch_block=None):
    N, cx, Hi, Wi = x.shape
    assert cx == IMG_C
    _, C, He, We = embedding.shape
    HW = He * We
    HWp = _round_up(HW, LANE)

    if batch_block is None:
        batch_block = 2 if N % 2 == 0 else 1
    B = batch_block
    assert N % B == 0, "batch must be divisible by the batch block"
    G = N // B

    # free reshapes (no transposes); pad the lane dim so loads/stores are dense
    x2 = x.reshape(N, IMG_C * Hi, Wi)
    px2 = pred_x.reshape(N, IMG_C * Hi, Wi)
    emb_flat = embedding.reshape(N, C, HW)
    if HWp != HW:
        emb_flat = jnp.pad(emb_flat, ((0, 0), (0, 0), (0, HWp - HW)))

    lh, rwt, s_mat = params["lh_all"], params["rwt_taps"], params["s_mat"]
    g_tile, m_mask = params["g_tile"], params["m_mask"]

    out_flat = pl.pallas_call(
        guided_attention_kernel,
        out_shape=jax.ShapeDtypeStruct((N, C, HWp), jnp.float32),
        grid=(G,),
        in_specs=[
            pl.BlockSpec((B, IMG_C * Hi, Wi), lambda g: (g, 0, 0)),
            pl.BlockSpec((B, IMG_C * Hi, Wi), lambda g: (g, 0, 0)),
            pl.BlockSpec(lh.shape, lambda g: (0, 0)),
            pl.BlockSpec(rwt.shape, lambda g: (0, 0, 0)),
            pl.BlockSpec(s_mat.shape, lambda g: (0, 0)),
            pl.BlockSpec(g_tile.shape, lambda g: (0, 0)),
            pl.BlockSpec(m_mask.shape, lambda g: (0, 0)),
            pl.BlockSpec((B, C, HWp), lambda g: (g, 0, 0)),
            pl.BlockSpec((C, C), lambda g: (0, 0)),
            pl.BlockSpec((C, 1), lambda g: (0, 0)),
        ],
        out_specs=pl.BlockSpec((B, C, HWp), lambda g: (g, 0, 0)),
        compiler_params=pltpu.CompilerParams(
            dimension_semantics=("parallel",)),    # even-extent axis -> v7x 2xTC
    )(x2, px2, lh, rwt, s_mat, g_tile, m_mask,
      emb_flat, params["w_h_folded_bf16"], params["shift_col"])

    return out_flat[:, :, :HW].reshape(N, C, He, We)


# --------------------------------------------------------------------------
# Host-side parameter folding
# --------------------------------------------------------------------------
def build_params(w_gate1, w_gate2, w_h, bn_gamma, bn_beta, bn_mean, bn_var,
                 Hi, Wi, He, We):
    w1 = np.asarray(w_gate1, np.float32)                   # (3,3,3,3) [co,ci,kh,kw]
    w2 = np.asarray(w_gate2, np.float32)[0, :, 0, 0]        # (3,)
    HW = He * We
    HWp = _round_up(HW, LANE)

    rh = _bilinear_matrix(He, Hi)                            # (He, Hi)
    rw = _bilinear_matrix(We, Wi)                            # (We, Wi)
    # fold the 3x3-conv zero padding into the interpolation matrices
    rh_pad = np.zeros((He + 2, Hi), np.float32); rh_pad[1:He + 1] = rh
    rw_pad = np.zeros((We + 2, Wi), np.float32); rw_pad[1:We + 1] = rw

    # left tap matrices: for each (kw, co) an (He, 3*Hi) block holding
    # sum_kh w1[co,ci,kh,kw] * Rh_pad[kh:kh+He] per ci column-block.
    Hb = _round_up(3 * He, 8)                                # sublane-aligned block
    lh_all = np.zeros((3 * Hb, 3 * Hi), np.float32)
    for kw in range(3):
        for co in range(3):
            for ci in range(3):
                blk = np.zeros((He, Hi), np.float32)
                for kh in range(3):
                    blk += w1[co, ci, kh, kw] * rh_pad[kh:kh + He, :]
                r0 = kw * Hb + co * He
                lh_all[r0:r0 + He, ci * Hi:(ci + 1) * Hi] = blk

    # right tap matrices (pre-transposed): (Wi, We) per kw
    rwt_taps = np.zeros((3, Wi, We), np.float32)
    for kw in range(3):
        rwt_taps[kw] = rw_pad[kw:kw + We, :].T

    # 1x1-conv (w2) channel-sum selector: gate = s_mat @ relu(acc)
    s_mat = np.zeros((He, Hb), np.float32)
    for co in range(3):
        s_mat[np.arange(He), co * He + np.arange(He)] = w2[co]

    # constants for the (He,We) -> (1,HWp) row-major flatten
    g_tile = np.zeros((We, HWp), np.float32)
    m_mask = np.zeros((He, HWp), np.float32)
    for h in range(He):
        for w in range(We):
            g_tile[w, h * We + w] = 1.0
            m_mask[h, h * We + w] = 1.0

    # eval-mode BatchNorm: fold scale into w_h (f32, then bf16 cast); keep shift
    scale = np.asarray(bn_gamma, np.float32) / np.sqrt(np.asarray(bn_var, np.float32) + 1e-5)
    shift = np.asarray(bn_beta, np.float32) - np.asarray(bn_mean, np.float32) * scale
    w_h_folded = np.asarray(w_h, np.float32) * scale[:, None]

    return dict(
        # kernel operands
        lh_all=jnp.asarray(lh_all),
        rwt_taps=jnp.asarray(rwt_taps),
        s_mat=jnp.asarray(s_mat),
        g_tile=jnp.asarray(g_tile),
        m_mask=jnp.asarray(m_mask),
        w_h_folded_bf16=jnp.asarray(w_h_folded).astype(jnp.bfloat16),
        shift_col=jnp.asarray(shift[:, None]),
        # reference operands
        rh=jnp.asarray(rh), rw=jnp.asarray(rw),
        w_gate1=jnp.asarray(w1), w_gate2=jnp.asarray(np.asarray(w_gate2, np.float32)),
        w_h=jnp.asarray(np.asarray(w_h, np.float32)),
        bn_gamma=jnp.asarray(bn_gamma), bn_beta=jnp.asarray(bn_beta),
        bn_mean=jnp.asarray(bn_mean), bn_var=jnp.asarray(bn_var),
    )


# --------------------------------------------------------------------------
# Pure-JAX f32 reference (module semantics, eval mode) for a sanity check
# --------------------------------------------------------------------------
def reference_forward(x, pred_x, embedding, params):
    hi = jax.lax.Precision.HIGHEST
    rh, rw = params["rh"], params["rw"]
    resid = jnp.abs(x - pred_x)
    resized = jnp.einsum("oi,ncij,pj->ncop", rh, resid, rw, precision=hi)
    conv = jax.lax.conv_general_dilated(
        resized, params["w_gate1"], window_strides=(1, 1),
        padding=((1, 1), (1, 1)),
        dimension_numbers=("NCHW", "OIHW", "NCHW"), precision=hi)
    conv = jnp.maximum(conv, 0.0)
    gate = jnp.einsum("oc,nchw->nohw", params["w_gate2"][:, :, 0, 0], conv,
                      precision=hi)
    res_map = jax.nn.sigmoid(gate)
    h_lin = jnp.einsum("oc,nchw->nohw", params["w_h"], embedding, precision=hi)
    scale = params["bn_gamma"] / jnp.sqrt(params["bn_var"] + 1e-5)
    shift = params["bn_beta"] - params["bn_mean"] * scale
    h_act = jnp.maximum(h_lin * scale[None, :, None, None]
                        + shift[None, :, None, None], 0.0)
    return res_map * h_act + embedding


if __name__ == "__main__":
    key = jax.random.PRNGKey(0)
    N, DEPTH = 4, 32          # small stand-in for depth=728
    Hi = Wi = 16              # input image spatial size
    He = We = 8               # embedding spatial size

    ks = jax.random.split(key, 8)
    x = jax.random.normal(ks[0], (N, IMG_C, Hi, Wi), jnp.float32)
    pred_x = jax.random.normal(ks[1], (N, IMG_C, Hi, Wi), jnp.float32)
    embedding = jax.random.normal(ks[2], (N, DEPTH, He, We), jnp.float32)

    # deterministic synthetic parameters (shapes from the module __init__)
    w_gate1 = 0.2 * jax.random.normal(ks[3], (IMG_C, IMG_C, 3, 3), jnp.float32)
    w_gate2 = 0.5 * jax.random.normal(ks[4], (1, IMG_C, 1, 1), jnp.float32)
    w_h = jax.random.normal(ks[5], (DEPTH, DEPTH), jnp.float32) / np.sqrt(DEPTH)
    bn_gamma = 1.0 + 0.1 * jax.random.normal(ks[6], (DEPTH,), jnp.float32)
    bn_beta = 0.1 * jax.random.normal(ks[7], (DEPTH,), jnp.float32)
    bn_mean = jnp.linspace(-0.1, 0.1, DEPTH, dtype=jnp.float32)
    bn_var = jnp.linspace(0.5, 1.5, DEPTH, dtype=jnp.float32)

    params = build_params(w_gate1, w_gate2, w_h, bn_gamma, bn_beta,
                          bn_mean, bn_var, Hi, Wi, He, We)

    out = guided_attention_forward(x, pred_x, embedding, params, batch_block=2)
    out = jax.block_until_ready(out)

    ref = reference_forward(x, pred_x, embedding, params)
    # tolerance covers the bf16 MXU inputs on the h-path matmul (f32 accumulate
    # throughout); the gated path and sigmoid are computed in f32.
    if not np.allclose(np.asarray(out), np.asarray(ref), rtol=2e-2, atol=4e-2):
        err = float(np.max(np.abs(np.asarray(out) - np.asarray(ref))))
        raise AssertionError(
            f"Pallas output does not match JAX reference (max|diff|={err:.3e})")
    print("KERNEL_OK")
</pallas_src>

<mosaic_0001>
module attributes {stable_mosaic.version = 11 : i64} {
  func.func @guided_attention_kernel(%arg0: i32, %arg1: memref<2x48x16xf32, #tpu.memory_space<vmem>>, %arg2: memref<2x48x16xf32, #tpu.memory_space<vmem>>, %arg3: memref<72x48xf32, #tpu.memory_space<vmem>>, %arg4: memref<3x16x8xf32, #tpu.memory_space<vmem>>, %arg5: memref<8x24xf32, #tpu.memory_space<vmem>>, %arg6: memref<8x128xf32, #tpu.memory_space<vmem>>, %arg7: memref<8x128xf32, #tpu.memory_space<vmem>>, %arg8: memref<2x32x128xf32, #tpu.memory_space<vmem>>, %arg9: memref<32x32xbf16, #tpu.memory_space<vmem>>, %arg10: memref<32x1xf32, #tpu.memory_space<vmem>>, %arg11: memref<2x32x128xf32, #tpu.memory_space<vmem>>) attributes {dimension_semantics = [#tpu.dimension_semantics<parallel>], iteration_bounds = array<i64: 2>, scalar_prefetch = 0 : i64, scratch_operands = 0 : i64, tpu.core_type = #tpu.core_type<tc>, window_params = [{transform_indices = @transform_0, window_bounds = array<i64: 2, 48, 16>}, {transform_indices = @transform_1, window_bounds = array<i64: 2, 48, 16>}, {pipeline_mode = #tpu.pipeline_mode<synchronous>, transform_indices = @transform_2, window_bounds = array<i64: 72, 48>}, {pipeline_mode = #tpu.pipeline_mode<synchronous>, transform_indices = @transform_3, window_bounds = array<i64: 3, 16, 8>}, {pipeline_mode = #tpu.pipeline_mode<synchronous>, transform_indices = @transform_4, window_bounds = array<i64: 8, 24>}, {pipeline_mode = #tpu.pipeline_mode<synchronous>, transform_indices = @transform_5, window_bounds = array<i64: 8, 128>}, {pipeline_mode = #tpu.pipeline_mode<synchronous>, transform_indices = @transform_6, window_bounds = array<i64: 8, 128>}, {transform_indices = @transform_7, window_bounds = array<i64: 2, 32, 128>}, {pipeline_mode = #tpu.pipeline_mode<synchronous>, transform_indices = @transform_8, window_bounds = array<i64: 32, 32>}, {pipeline_mode = #tpu.pipeline_mode<synchronous>, transform_indices = @transform_9, window_bounds = array<i64: 32, 1>}, {transform_indices = @transform_10, window_bounds = array<i64: 2, 32, 128>}]} {
    %c0 = arith.constant 0 : index
    %c0_0 = arith.constant 0 : index
    %0 = vector.load %arg3[%c0, %c0_0] : memref<72x48xf32, #tpu.memory_space<vmem>>, vector<72x48xf32>
    %c0_1 = arith.constant 0 : index
    %c0_2 = arith.constant 0 : index
    %c0_3 = arith.constant 0 : index
    %1 = vector.load %arg4[%c0_1, %c0_2, %c0_3] : memref<3x16x8xf32, #tpu.memory_space<vmem>>, vector<1x16x8xf32>
    %2 = vector.shape_cast %1 : vector<1x16x8xf32> to vector<16x8xf32>
    %c1 = arith.constant 1 : index
    %c0_4 = arith.constant 0 : index
    %c0_5 = arith.constant 0 : index
    %3 = vector.load %arg4[%c1, %c0_4, %c0_5] : memref<3x16x8xf32, #tpu.memory_space<vmem>>, vector<1x16x8xf32>
    %4 = vector.shape_cast %3 : vector<1x16x8xf32> to vector<16x8xf32>
    %c2 = arith.constant 2 : index
    %c0_6 = arith.constant 0 : index
    %c0_7 = arith.constant 0 : index
    %5 = vector.load %arg4[%c2, %c0_6, %c0_7] : memref<3x16x8xf32, #tpu.memory_space<vmem>>, vector<1x16x8xf32>
    %6 = vector.shape_cast %5 : vector<1x16x8xf32> to vector<16x8xf32>
    %c0_8 = arith.constant 0 : index
    %c0_9 = arith.constant 0 : index
    %7 = vector.load %arg5[%c0_8, %c0_9] : memref<8x24xf32, #tpu.memory_space<vmem>>, vector<8x24xf32>
    %c0_10 = arith.constant 0 : index
    %c0_11 = arith.constant 0 : index
    %8 = vector.load %arg6[%c0_10, %c0_11] : memref<8x128xf32, #tpu.memory_space<vmem>>, vector<8x128xf32>
    %c0_12 = arith.constant 0 : index
    %c0_13 = arith.constant 0 : index
    %9 = vector.load %arg7[%c0_12, %c0_13] : memref<8x128xf32, #tpu.memory_space<vmem>>, vector<8x128xf32>
    %c0_14 = arith.constant 0 : index
    %c0_15 = arith.constant 0 : index
    %10 = vector.load %arg9[%c0_14, %c0_15] : memref<32x32xbf16, #tpu.memory_space<vmem>>, vector<32x32xbf16>
    %c0_16 = arith.constant 0 : index
    %c0_17 = arith.constant 0 : index
    %11 = vector.load %arg10[%c0_16, %c0_17] : memref<32x1xf32, #tpu.memory_space<vmem>>, vector<32x1xf32>
    %c0_18 = arith.constant 0 : index
    %c0_19 = arith.constant 0 : index
    %c0_20 = arith.constant 0 : index
    %12 = vector.load %arg1[%c0_18, %c0_19, %c0_20] : memref<2x48x16xf32, #tpu.memory_space<vmem>>, vector<1x48x16xf32>
    %13 = vector.shape_cast %12 : vector<1x48x16xf32> to vector<48x16xf32>
    %c0_21 = arith.constant 0 : index
    %c0_22 = arith.constant 0 : index
    %c0_23 = arith.constant 0 : index
    %14 = vector.load %arg2[%c0_21, %c0_22, %c0_23] : memref<2x48x16xf32, #tpu.memory_space<vmem>>, vector<1x48x16xf32>
    %15 = vector.shape_cast %14 : vector<1x48x16xf32> to vector<48x16xf32>
    %16 = arith.subf %13, %15 : vector<48x16xf32>
    %17 = math.absf %16 : vector<48x16xf32>
    %cst = arith.constant dense<0.000000e+00> : vector<72x16xf32>
    %18 = tpu.matmul %0, %17, %cst {dimension_numbers = #tpu.dot_dimension_numbers<[1], [0], [0], [1], [0, 0, 1, 1], [], []>} : vector<72x48xf32>, vector<48x16xf32>, vector<72x16xf32> -> vector<72x16xf32>
    %19 = vector.extract_strided_slice %18 {offsets = [0, 0], sizes = [24, 16], strides = [1, 1]} : vector<72x16xf32> to vector<24x16xf32>
    %cst_24 = arith.constant dense<0.000000e+00> : vector<24x8xf32>
    %20 = tpu.matmul %19, %2, %cst_24 {dimension_numbers = #tpu.dot_dimension_numbers<[1], [0], [0], [1], [0, 0, 1, 1], [], []>} : vector<24x16xf32>, vector<16x8xf32>, vector<24x8xf32> -> vector<24x8xf32>
    %21 = vector.extract_strided_slice %18 {offsets = [24, 0], sizes = [24, 16], strides = [1, 1]} : vector<72x16xf32> to vector<24x16xf32>
    %cst_25 = arith.constant dense<0.000000e+00> : vector<24x8xf32>
    %22 = tpu.matmul %21, %4, %cst_25 {dimension_numbers = #tpu.dot_dimension_numbers<[1], [0], [0], [1], [0, 0, 1, 1], [], []>} : vector<24x16xf32>, vector<16x8xf32>, vector<24x8xf32> -> vector<24x8xf32>
    %23 = arith.addf %20, %22 : vector<24x8xf32>
    %24 = vector.extract_strided_slice %18 {offsets = [48, 0], sizes = [24, 16], strides = [1, 1]} : vector<72x16xf32> to vector<24x16xf32>
    %cst_26 = arith.constant dense<0.000000e+00> : vector<24x8xf32>
    %25 = tpu.matmul %24, %6, %cst_26 {dimension_numbers = #tpu.dot_dimension_numbers<[1], [0], [0], [1], [0, 0, 1, 1], [], []>} : vector<24x16xf32>, vector<16x8xf32>, vector<24x8xf32> -> vector<24x8xf32>
    %26 = arith.addf %23, %25 : vector<24x8xf32>
    %cst_27 = arith.constant 0.000000e+00 : f32
    %27 = vector.broadcast %cst_27 : f32 to vector<24x8xf32>
    %28 = arith.maximumf %26, %27 : vector<24x8xf32>
    %cst_28 = arith.constant dense<0.000000e+00> : vector<8x8xf32>
    %29 = tpu.matmul %7, %28, %cst_28 {dimension_numbers = #tpu.dot_dimension_numbers<[1], [0], [0], [1], [0, 0, 1, 1], [], []>} : vector<8x24xf32>, vector<24x8xf32>, vector<8x8xf32> -> vector<8x8xf32>
    %cst_29 = arith.constant 0.000000e+00 : f32
    %30 = vector.broadcast %cst_29 : f32 to vector<8x8xf32>
    %31 = arith.subf %30, %29 : vector<8x8xf32>
    %32 = math.exp %31 : vector<8x8xf32>
    %cst_30 = arith.constant 1.000000e+00 : f32
    %33 = vector.broadcast %cst_30 : f32 to vector<8x8xf32>
    %34 = arith.addf %33, %32 : vector<8x8xf32>
    %cst_31 = arith.constant 1.000000e+00 : f32
    %35 = vector.broadcast %cst_31 : f32 to vector<8x8xf32>
    %36 = arith.divf %35, %34 : vector<8x8xf32>
    %cst_32 = arith.constant dense<0.000000e+00> : vector<8x128xf32>
    %37 = tpu.matmul %36, %8, %cst_32 {dimension_numbers = #tpu.dot_dimension_numbers<[1], [0], [0], [1], [0, 0, 1, 1], [], []>} : vector<8x8xf32>, vector<8x128xf32>, vector<8x128xf32> -> vector<8x128xf32>
    %38 = arith.mulf %37, %9 : vector<8x128xf32>
    %cst_33 = arith.constant dense<0.000000e+00> : vector<128xf32>
    %39 = vector.multi_reduction <add>, %38, %cst_33 [0] : vector<8x128xf32> to vector<128xf32>
    %40 = vector.shape_cast %39 : vector<128xf32> to vector<1x128xf32>
    %c0_34 = arith.constant 0 : index
    %c0_35 = arith.constant 0 : index
    %c0_36 = arith.constant 0 : index
    %41 = vector.load %arg8[%c0_34, %c0_35, %c0_36] : memref<2x32x128xf32, #tpu.memory_space<vmem>>, vector<1x32x128xf32>
    %42 = vector.shape_cast %41 : vector<1x32x128xf32> to vector<32x128xf32>
    %43 = arith.truncf %42 : vector<32x128xf32> to vector<32x128xbf16>
    %cst_37 = arith.constant dense<0.000000e+00> : vector<32x128xf32>
    %44 = tpu.matmul %10, %43, %cst_37 {dimension_numbers = #tpu.dot_dimension_numbers<[1], [0], [0], [1], [0, 0, 1, 1], [], []>} : vector<32x32xbf16>, vector<32x128xbf16>, vector<32x128xf32> -> vector<32x128xf32>
    %45 = vector.broadcast %11 : vector<32x1xf32> to vector<32x128xf32>
    %46 = arith.addf %44, %45 : vector<32x128xf32>
    %cst_38 = arith.constant 0.000000e+00 : f32
    %47 = vector.broadcast %cst_38 : f32 to vector<32x128xf32>
    %48 = arith.maximumf %46, %47 : vector<32x128xf32>
    %49 = vector.broadcast %40 : vector<1x128xf32> to vector<32x128xf32>
    %50 = arith.mulf %49, %48 : vector<32x128xf32>
    %51 = arith.addf %50, %42 : vector<32x128xf32>
    %c0_39 = arith.constant 0 : index
    %c0_40 = arith.constant 0 : index
    %c0_41 = arith.constant 0 : index
    %52 = vector.load %arg11[%c0_39, %c0_40, %c0_41] : memref<2x32x128xf32, #tpu.memory_space<vmem>>, vector<1x32x128xf32>
    %53 = vector.shape_cast %52 : vector<1x32x128xf32> to vector<32x128xf32>
    %54 = vector.shape_cast %51 : vector<32x128xf32> to vector<1x32x128xf32>
    tpu.vector_store %arg11[%c0_39, %c0_40, %c0_41], %54 {strides = array<i32>} : memref<2x32x128xf32, #tpu.memory_space<vmem>>, vector<1x32x128xf32>,
    %c1_42 = arith.constant 1 : index
    %c0_43 = arith.constant 0 : index
    %c0_44 = arith.constant 0 : index
    %55 = vector.load %arg1[%c1_42, %c0_43, %c0_44] : memref<2x48x16xf32, #tpu.memory_space<vmem>>, vector<1x48x16xf32>
    %56 = vector.shape_cast %55 : vector<1x48x16xf32> to vector<48x16xf32>
    %c1_45 = arith.constant 1 : index
    %c0_46 = arith.constant 0 : index
    %c0_47 = arith.constant 0 : index
    %57 = vector.load %arg2[%c1_45, %c0_46, %c0_47] : memref<2x48x16xf32, #tpu.memory_space<vmem>>, vector<1x48x16xf32>
    %58 = vector.shape_cast %57 : vector<1x48x16xf32> to vector<48x16xf32>
    %59 = arith.subf %56, %58 : vector<48x16xf32>
    %60 = math.absf %59 : vector<48x16xf32>
    %cst_48 = arith.constant dense<0.000000e+00> : vector<72x16xf32>
    %61 = tpu.matmul %0, %60, %cst_48 {dimension_numbers = #tpu.dot_dimension_numbers<[1], [0], [0], [1], [0, 0, 1, 1], [], []>} : vector<72x48xf32>, vector<48x16xf32>, vector<72x16xf32> -> vector<72x16xf32>
    %62 = vector.extract_strided_slice %61 {offsets = [0, 0], sizes = [24, 16], strides = [1, 1]} : vector<72x16xf32> to vector<24x16xf32>
    %cst_49 = arith.constant dense<0.000000e+00> : vector<24x8xf32>
    %63 = tpu.matmul %62, %2, %cst_49 {dimension_numbers = #tpu.dot_dimension_numbers<[1], [0], [0], [1], [0, 0, 1, 1], [], []>} : vector<24x16xf32>, vector<16x8xf32>, vector<24x8xf32> -> vector<24x8xf32>
    %64 = vector.extract_strided_slice %61 {offsets = [24, 0], sizes = [24, 16], strides = [1, 1]} : vector<72x16xf32> to vector<24x16xf32>
    %cst_50 = arith.constant dense<0.000000e+00> : vector<24x8xf32>
    %65 = tpu.matmul %64, %4, %cst_50 {dimension_numbers = #tpu.dot_dimension_numbers<[1], [0], [0], [1], [0, 0, 1, 1], [], []>} : vector<24x16xf32>, vector<16x8xf32>, vector<24x8xf32> -> vector<24x8xf32>
    %66 = arith.addf %63, %65 : vector<24x8xf32>
    %67 = vector.extract_strided_slice %61 {offsets = [48, 0], sizes = [24, 16], strides = [1, 1]} : vector<72x16xf32> to vector<24x16xf32>
    %cst_51 = arith.constant dense<0.000000e+00> : vector<24x8xf32>
    %68 = tpu.matmul %67, %6, %cst_51 {dimension_numbers = #tpu.dot_dimension_numbers<[1], [0], [0], [1], [0, 0, 1, 1], [], []>} : vector<24x16xf32>, vector<16x8xf32>, vector<24x8xf32> -> vector<24x8xf32>
    %69 = arith.addf %66, %68 : vector<24x8xf32>
    %cst_52 = arith.constant 0.000000e+00 : f32
    %70 = vector.broadcast %cst_52 : f32 to vector<24x8xf32>
    %71 = arith.maximumf %69, %70 : vector<24x8xf32>
    %cst_53 = arith.constant dense<0.000000e+00> : vector<8x8xf32>
    %72 = tpu.matmul %7, %71, %cst_53 {dimension_numbers = #tpu.dot_dimension_numbers<[1], [0], [0], [1], [0, 0, 1, 1], [], []>} : vector<8x24xf32>, vector<24x8xf32>, vector<8x8xf32> -> vector<8x8xf32>
    %cst_54 = arith.constant 0.000000e+00 : f32
    %73 = vector.broadcast %cst_54 : f32 to vector<8x8xf32>
    %74 = arith.subf %73, %72 : vector<8x8xf32>
    %75 = math.exp %74 : vector<8x8xf32>
    %cst_55 = arith.constant 1.000000e+00 : f32
    %76 = vector.broadcast %cst_55 : f32 to vector<8x8xf32>
    %77 = arith.addf %76, %75 : vector<8x8xf32>
    %cst_56 = arith.constant 1.000000e+00 : f32
    %78 = vector.broadcast %cst_56 : f32 to vector<8x8xf32>
    %79 = arith.divf %78, %77 : vector<8x8xf32>
    %cst_57 = arith.constant dense<0.000000e+00> : vector<8x128xf32>
    %80 = tpu.matmul %79, %8, %cst_57 {dimension_numbers = #tpu.dot_dimension_numbers<[1], [0], [0], [1], [0, 0, 1, 1], [], []>} : vector<8x8xf32>, vector<8x128xf32>, vector<8x128xf32> -> vector<8x128xf32>
    %81 = arith.mulf %80, %9 : vector<8x128xf32>
    %cst_58 = arith.constant dense<0.000000e+00> : vector<128xf32>
    %82 = vector.multi_reduction <add>, %81, %cst_58 [0] : vector<8x128xf32> to vector<128xf32>
    %83 = vector.shape_cast %82 : vector<128xf32> to vector<1x128xf32>
    %c1_59 = arith.constant 1 : index
    %c0_60 = arith.constant 0 : index
    %c0_61 = arith.constant 0 : index
    %84 = vector.load %arg8[%c1_59, %c0_60, %c0_61] : memref<2x32x128xf32, #tpu.memory_space<vmem>>, vector<1x32x128xf32>
    %85 = vector.shape_cast %84 : vector<1x32x128xf32> to vector<32x128xf32>
    %86 = arith.truncf %85 : vector<32x128xf32> to vector<32x128xbf16>
    %cst_62 = arith.constant dense<0.000000e+00> : vector<32x128xf32>
    %87 = tpu.matmul %10, %86, %cst_62 {dimension_numbers = #tpu.dot_dimension_numbers<[1], [0], [0], [1], [0, 0, 1, 1], [], []>} : vector<32x32xbf16>, vector<32x128xbf16>, vector<32x128xf32> -> vector<32x128xf32>
    %88 = vector.broadcast %11 : vector<32x1xf32> to vector<32x128xf32>
    %89 = arith.addf %87, %88 : vector<32x128xf32>
    %cst_63 = arith.constant 0.000000e+00 : f32
    %90 = vector.broadcast %cst_63 : f32 to vector<32x128xf32>
    %91 = arith.maximumf %89, %90 : vector<32x128xf32>
    %92 = vector.broadcast %83 : vector<1x128xf32> to vector<32x128xf32>
    %93 = arith.mulf %92, %91 : vector<32x128xf32>
    %94 = arith.addf %93, %85 : vector<32x128xf32>
    %c1_64 = arith.constant 1 : index
    %c0_65 = arith.constant 0 : index
    %c0_66 = arith.constant 0 : index
    %95 = vector.load %arg11[%c1_64, %c0_65, %c0_66] : memref<2x32x128xf32, #tpu.memory_space<vmem>>, vector<1x32x128xf32>
    %96 = vector.shape_cast %95 : vector<1x32x128xf32> to vector<32x128xf32>
    %97 = vector.shape_cast %94 : vector<32x128xf32> to vector<1x32x128xf32>
    tpu.vector_store %arg11[%c1_64, %c0_65, %c0_66], %97 {strides = array<i32>} : memref<2x32x128xf32, #tpu.memory_space<vmem>>, vector<1x32x128xf32>,
    return
  }
  func.func @transform_0(%arg0: i32) -> (i32, i32, i32) {
    %c0_i32 = arith.constant 0 : i32
    %c0_i32_0 = arith.constant 0 : i32
    %c0_i32_1 = arith.constant 0 : i32
    return %arg0, %c0_i32, %c0_i32_0 : i32, i32, i32
  }
  func.func @transform_1(%arg0: i32) -> (i32, i32, i32) {
    %c0_i32 = arith.constant 0 : i32
    %c0_i32_0 = arith.constant 0 : i32
    %c0_i32_1 = arith.constant 0 : i32
    return %arg0, %c0_i32, %c0_i32_0 : i32, i32, i32
  }
  func.func @transform_2(%arg0: i32) -> (i32, i32) {
    %c0_i32 = arith.constant 0 : i32
    %c0_i32_0 = arith.constant 0 : i32
    %c0_i32_1 = arith.constant 0 : i32
    return %c0_i32, %c0_i32_0 : i32, i32
  }
  func.func @transform_3(%arg0: i32) -> (i32, i32, i32) {
    %c0_i32 = arith.constant 0 : i32
    %c0_i32_0 = arith.constant 0 : i32
    %c0_i32_1 = arith.constant 0 : i32
    %c0_i32_2 = arith.constant 0 : i32
    return %c0_i32, %c0_i32_0, %c0_i32_1 : i32, i32, i32
  }
  func.func @transform_4(%arg0: i32) -> (i32, i32) {
    %c0_i32 = arith.constant 0 : i32
    %c0_i32_0 = arith.constant 0 : i32
    %c0_i32_1 = arith.constant 0 : i32
    return %c0_i32, %c0_i32_0 : i32, i32
  }
  func.func @transform_5(%arg0: i32) -> (i32, i32) {
    %c0_i32 = arith.constant 0 : i32
    %c0_i32_0 = arith.constant 0 : i32
    %c0_i32_1 = arith.constant 0 : i32
    return %c0_i32, %c0_i32_0 : i32, i32
  }
  func.func @transform_6(%arg0: i32) -> (i32, i32) {
    %c0_i32 = arith.constant 0 : i32
    %c0_i32_0 = arith.constant 0 : i32
    %c0_i32_1 = arith.constant 0 : i32
    return %c0_i32, %c0_i32_0 : i32, i32
  }
  func.func @transform_7(%arg0: i32) -> (i32, i32, i32) {
    %c0_i32 = arith.constant 0 : i32
    %c0_i32_0 = arith.constant 0 : i32
    %c0_i32_1 = arith.constant 0 : i32
    return %arg0, %c0_i32, %c0_i32_0 : i32, i32, i32
  }
  func.func @transform_8(%arg0: i32) -> (i32, i32) {
    %c0_i32 = arith.constant 0 : i32
    %c0_i32_0 = arith.constant 0 : i32
    %c0_i32_1 = arith.constant 0 : i32
    return %c0_i32, %c0_i32_0 : i32, i32
  }
  func.func @transform_9(%arg0: i32) -> (i32, i32) {
    %c0_i32 = arith.constant 0 : i32
    %c0_i32_0 = arith.constant 0 : i32
    %c0_i32_1 = arith.constant 0 : i32
    return %c0_i32, %c0_i32_0 : i32, i32
  }
  func.func @transform_10(%arg0: i32) -> (i32, i32, i32) {
    %c0_i32 = arith.constant 0 : i32
    %c0_i32_0 = arith.constant 0 : i32
    %c0_i32_1 = arith.constant 0 : i32
    return %arg0, %c0_i32, %c0_i32_0 : i32, i32, i32
  }
}

</mosaic_0001>

<llo_original>
// kernel: tpu_custom_call.1
$region0: #{tpu_custom_call.1}
  #allocation0 [shape = 'u32[]', space=smem, size = 0x4, offset = 0x4, fixed_abs, tag = 'smem constant byte address 0x4 - core index']
  #allocation1 [shape = 'u32[144,128]{1,0:T(1,128)}', space=vmem, size = 0x12000, scoped, tag = 'internal scratch']
  %s0 = inlined_call_operand.vmem [shape: f32[4,48,16], index: 0, kind: input, shape index: {}]
  %s1 = inlined_call_operand.vmem [shape: f32[4,48,16], index: 1, kind: input, shape index: {}]
  %s2 = inlined_call_operand.vmem [shape: f32[72,48], index: 2, kind: input, shape index: {}]
  %s3 = inlined_call_operand.vmem [shape: f32[3,16,8], index: 3, kind: input, shape index: {}]
  %s4 = inlined_call_operand.vmem [shape: f32[8,24], index: 4, kind: input, shape index: {}]
  %s5 = inlined_call_operand.vmem [shape: f32[8,128], index: 5, kind: input, shape index: {}]
  %s6 = inlined_call_operand.vmem [shape: f32[8,128], index: 6, kind: input, shape index: {}]
  %s7 = inlined_call_operand.vmem [shape: f32[4,32,128], index: 7, kind: input, shape index: {}]
  %s8 = inlined_call_operand.vmem [shape: bf16[32,32], index: 8, kind: input, shape index: {}]
  %s9 = inlined_call_operand.vmem [shape: f32[32,1], index: 9, kind: input, shape index: {}]
  %s10 = inlined_call_operand.hbm [shape: f32[4,32,128], index: 10, kind: output, shape index: {}]
  %s11 = sld [smem:[#allocation0]]
  $region73: #{tpu_custom_call.1} parent=0
    _
  %s13 = ssub.s32 1, %s11
  %s14 = scalar_select 0, %s13, %s11
  $region1: #{tpu_custom_call.1} parent=0
    #allocation2 [shape = 'u8[65536]{0}', space=vmem, size = 0x10000, scoped, tag = 'output window, operand 0']
    #allocation3 [shape = 's32[2]{0}', space=sflag, size = 0x8, scoped, tag = 'scoped memory for tpu_custom_call.1']
    %15 = vsyncpa [#allocation3], 0
    %s16 = scalar_lea.sflag [#allocation3], 1
    %17 = vsyncpa %s16, 0
    loop: start=0, step=1, limit=4
    $region2: #{tpu_custom_call.1} parent=1 // loop_pre_header
      _
    $region3: #{tpu_custom_call.1} parent=1 // loop_header
      %s19 = sphi 0, %s23
      %p20 = scmp.ge.s32.totalorder %s19, 4
      %s29 = sphi 0, %s31
      %s32 = sphi 0, %s29
      %s33 = sphi 0, %s32
      %s49 = sphi 0, %s33
      %s55 = sphi 0, %s57
      %s58 = sphi 0, %s55
      %s59 = sphi 0, %s58
      %s75 = sphi 0, %s59
      %s79 = sphi 0, %s79
      %s81 = sphi 0, %s79
      %s82 = sphi 0, %s81
      %s96 = sphi 0, %s82
      %s100 = sphi 0, %s100
      %s102 = sphi 0, %s100
      %s103 = sphi 0, %s102
      %s117 = sphi 0, %s103
      %s121 = sphi 0, %s121
      %s123 = sphi 0, %s121
      %s124 = sphi 0, %s123
      %s138 = sphi 0, %s124
      %s142 = sphi 0, %s142
      %s144 = sphi 0, %s142
      %s145 = sphi 0, %s144
      %s159 = sphi 0, %s145
      %s163 = sphi 0, %s163
      %s165 = sphi 0, %s163
      %s166 = sphi 0, %s165
      %s180 = sphi 0, %s166
      %s186 = sphi 0, %s188
      %s189 = sphi 0, %s186
      %s190 = sphi 0, %s189
      %s206 = sphi 0, %s190
      %s210 = sphi 0, %s210
      %s212 = sphi 0, %s210
      %s213 = sphi 0, %s212
      %s227 = sphi 0, %s213
      %s231 = sphi 0, %s231
      %s233 = sphi 0, %s231
      %s234 = sphi 0, %s233
      %s248 = sphi 0, %s234
      %s254 = sphi 0, %s256
      %s257 = sphi 0, %s254
      %s258 = sphi 0, %s257
      %s274 = sphi 0, %s258
    $region4: #{tpu_custom_call.1} parent=1 // loop_header_branch
      %22 = sbr.rel (%p20) target = $region8
    $region5: #{tpu_custom_call.1} parent=1 // loop_body
      %s24 = ssub.s32 %s19, 1
      %s25 = ssub.s32 %s19, 2
      %s26 = sadd.s32 %s19, 1
      %s27 = ssub.s32 %s19, %s26
      %p28 = scmp.eq.s32.totalorder %s27, 0
      %s30 = sadd.s32 %s29, 1
      %s31 = scalar_select %p28, %s29, %s30
      %p34 = pneg %p28
      %p35 = scmp.eq.s32.totalorder %s19, 1
      %p36 = por %p34, %p35
      %p37 = scmp.ne.s32.totalorder %s29, %s32
      %p38 = scmp.eq.s32.totalorder %s19, 0
      %p39 = por %p37, %p38
      %p40 = scmp.ne.s32.totalorder %s29, %s32
      %p41 = scmp.eq.s32.totalorder %s24, 1
      %p42 = por %p40, %p41
      %p43 = scmp.ne.s32.totalorder %s32, %s33
      %p44 = scmp.eq.s32.totalorder %s24, 0
      %p45 = por %p43, %p44
      %p46 = scmp.ne.s32.totalorder %s32, %s33
      %p47 = scmp.eq.s32.totalorder %s25, 1
      %p48 = por %p46, %p47
      %p50 = scmp.ne.s32.totalorder %s33, %s49
      %p51 = scmp.eq.s32.totalorder %s25, 0
      %p52 = por %p50, %p51
      %s53 = ssub.s32 %s19, %s26
      %p54 = scmp.eq.s32.totalorder %s53, 0
      %s56 = sadd.s32 %s55, 1
      %s57 = scalar_select %p54, %s55, %s56
      %p60 = pneg %p54
      %p61 = scmp.eq.s32.totalorder %s19, 1
      %p62 = por %p60, %p61
      %p63 = scmp.ne.s32.totalorder %s55, %s58
      %p64 = scmp.eq.s32.totalorder %s19, 0
      %p65 = por %p63, %p64
      %p66 = scmp.ne.s32.totalorder %s55, %s58
      %p67 = scmp.eq.s32.totalorder %s24, 1
      %p68 = por %p66, %p67
      %p69 = scmp.ne.s32.totalorder %s58, %s59
      %p70 = scmp.eq.s32.totalorder %s24, 0
      %p71 = por %p69, %p70
      %p72 = scmp.ne.s32.totalorder %s58, %s59
      %p73 = scmp.eq.s32.totalorder %s25, 1
      %p74 = por %p72, %p73
      %p76 = scmp.ne.s32.totalorder %s59, %s75
      %p77 = scmp.eq.s32.totalorder %s25, 0
      %p78 = por %p76, %p77
      %s80 = sadd.s32 %s79, 1
      %p83 = scmp.eq.s32.totalorder %s19, 1
      %p84 = scmp.ne.s32.totalorder %s79, %s81
      %p85 = scmp.eq.s32.totalorder %s19, 0
      %p86 = por %p84, %p85
      %p87 = scmp.ne.s32.totalorder %s79, %s81
      %p88 = scmp.eq.s32.totalorder %s24, 1
      %p89 = por %p87, %p88
      %p90 = scmp.ne.s32.totalorder %s81, %s82
      %p91 = scmp.eq.s32.totalorder %s24, 0
      %p92 = por %p90, %p91
      %p93 = scmp.ne.s32.totalorder %s81, %s82
      %p94 = scmp.eq.s32.totalorder %s25, 1
      %p95 = por %p93, %p94
      %p97 = scmp.ne.s32.totalorder %s82, %s96
      %p98 = scmp.eq.s32.totalorder %s25, 0
      %p99 = por %p97, %p98
      %s101 = sadd.s32 %s100, 1
      %p104 = scmp.eq.s32.totalorder %s19, 1
      %p105 = scmp.ne.s32.totalorder %s100, %s102
      %p106 = scmp.eq.s32.totalorder %s19, 0
      %p107 = por %p105, %p106
      %p108 = scmp.ne.s32.totalorder %s100, %s102
      %p109 = scmp.eq.s32.totalorder %s24, 1
      %p110 = por %p108, %p109
      %p111 = scmp.ne.s32.totalorder %s102, %s103
      %p112 = scmp.eq.s32.totalorder %s24, 0
      %p113 = por %p111, %p112
      %p114 = scmp.ne.s32.totalorder %s102, %s103
      %p115 = scmp.eq.s32.totalorder %s25, 1
      %p116 = por %p114, %p115
      %p118 = scmp.ne.s32.totalorder %s103, %s117
      %p119 = scmp.eq.s32.totalorder %s25, 0
      %p120 = por %p118, %p119
      %s122 = sadd.s32 %s121, 1
      %p125 = scmp.eq.s32.totalorder %s19, 1
      %p126 = scmp.ne.s32.totalorder %s121, %s123
      %p127 = scmp.eq.s32.totalorder %s19, 0
      %p128 = por %p126, %p127
      %p129 = scmp.ne.s32.totalorder %s121, %s123
      %p130 = scmp.eq.s32.totalorder %s24, 1
      %p131 = por %p129, %p130
      %p132 = scmp.ne.s32.totalorder %s123, %s124
      %p133 = scmp.eq.s32.totalorder %s24, 0
      %p134 = por %p132, %p133
      %p135 = scmp.ne.s32.totalorder %s123, %s124
      %p136 = scmp.eq.s32.totalorder %s25, 1
      %p137 = por %p135, %p136
      %p139 = scmp.ne.s32.totalorder %s124, %s138
      %p140 = scmp.eq.s32.totalorder %s25, 0
      %p141 = por %p139, %p140
      %s143 = sadd.s32 %s142, 1
      %p146 = scmp.eq.s32.totalorder %s19, 1
      %p147 = scmp.ne.s32.totalorder %s142, %s144
      %p148 = scmp.eq.s32.totalorder %s19, 0
      %p149 = por %p147, %p148
      %p150 = scmp.ne.s32.totalorder %s142, %s144
      %p151 = scmp.eq.s32.totalorder %s24, 1
      %p152 = por %p150, %p151
      %p153 = scmp.ne.s32.totalorder %s144, %s145
      %p154 = scmp.eq.s32.totalorder %s24, 0
      %p155 = por %p153, %p154
      %p156 = scmp.ne.s32.totalorder %s144, %s145
      %p157 = scmp.eq.s32.totalorder %s25, 1
      %p158 = por %p156, %p157
      %p160 = scmp.ne.s32.totalorder %s145, %s159
      %p161 = scmp.eq.s32.totalorder %s25, 0
      %p162 = por %p160, %p161
      %s164 = sadd.s32 %s163, 1
      %p167 = scmp.eq.s32.totalorder %s19, 1
      %p168 = scmp.ne.s32.totalorder %s163, %s165
      %p169 = scmp.eq.s32.totalorder %s19, 0
      %p170 = por %p168, %p169
      %p171 = scmp.ne.s32.totalorder %s163, %s165
      %p172 = scmp.eq.s32.totalorder %s24, 1
      %p173 = por %p171, %p172
      %p174 = scmp.ne.s32.totalorder %s165, %s166
      %p175 = scmp.eq.s32.totalorder %s24, 0
      %p176 = por %p174, %p175
      %p177 = scmp.ne.s32.totalorder %s165, %s166
      %p178 = scmp.eq.s32.totalorder %s25, 1
      %p179 = por %p177, %p178
      %p181 = scmp.ne.s32.totalorder %s166, %s180
      %p182 = scmp.eq.s32.totalorder %s25, 0
      %p183 = por %p181, %p182
      %s184 = ssub.s32 %s19, %s26
      %p185 = scmp.eq.s32.totalorder %s184, 0
      %s187 = sadd.s32 %s186, 1
      %s188 = scalar_select %p185, %s186, %s187
      %p191 = pneg %p185
      %p192 = scmp.eq.s32.totalorder %s19, 1
      %p193 = por %p191, %p192
      %p194 = scmp.ne.s32.totalorder %s186, %s189
      %p195 = scmp.eq.s32.totalorder %s19, 0
      %p196 = por %p194, %p195
      %p197 = scmp.ne.s32.totalorder %s186, %s189
      %p198 = scmp.eq.s32.totalorder %s24, 1
      %p199 = por %p197, %p198
      %p200 = scmp.ne.s32.totalorder %s189, %s190
      %p201 = scmp.eq.s32.totalorder %s24, 0
      %p202 = por %p200, %p201
      %p203 = scmp.ne.s32.totalorder %s189, %s190
      %p204 = scmp.eq.s32.totalorder %s25, 1
      %p205 = por %p203, %p204
      %p207 = scmp.ne.s32.totalorder %s190, %s206
      %p208 = scmp.eq.s32.totalorder %s25, 0
      %p209 = por %p207, %p208
      %s211 = sadd.s32 %s210, 1
      %p214 = scmp.eq.s32.totalorder %s19, 1
      %p215 = scmp.ne.s32.totalorder %s210, %s212
      %p216 = scmp.eq.s32.totalorder %s19, 0
      %p217 = por %p215, %p216
      %p218 = scmp.ne.s32.totalorder %s210, %s212
      %p219 = scmp.eq.s32.totalorder %s24, 1
      %p220 = por %p218, %p219
      %p221 = scmp.ne.s32.totalorder %s212, %s213
      %p222 = scmp.eq.s32.totalorder %s24, 0
      %p223 = por %p221, %p222
      %p224 = scmp.ne.s32.totalorder %s212, %s213
      %p225 = scmp.eq.s32.totalorder %s25, 1
      %p226 = por %p224, %p225
      %p228 = scmp.ne.s32.totalorder %s213, %s227
      %p229 = scmp.eq.s32.totalorder %s25, 0
      %p230 = por %p228, %p229
      %s232 = sadd.s32 %s231, 1
      %p235 = scmp.eq.s32.totalorder %s19, 1
      %p236 = scmp.ne.s32.totalorder %s231, %s233
      %p237 = scmp.eq.s32.totalorder %s19, 0
      %p238 = por %p236, %p237
      %p239 = scmp.ne.s32.totalorder %s231, %s233
      %p240 = scmp.eq.s32.totalorder %s24, 1
      %p241 = por %p239, %p240
      %p242 = scmp.ne.s32.totalorder %s233, %s234
      %p243 = scmp.eq.s32.totalorder %s24, 0
      %p244 = por %p242, %p243
      %p245 = scmp.ne.s32.totalorder %s233, %s234
      %p246 = scmp.eq.s32.totalorder %s25, 1
      %p247 = por %p245, %p246
      %p249 = scmp.ne.s32.totalorder %s234, %s248
      %p250 = scmp.eq.s32.totalorder %s25, 0
      %p251 = por %p249, %p250
      %s252 = ssub.s32 %s19, %s26
      %p253 = scmp.eq.s32.totalorder %s252, 0
      %s255 = sadd.s32 %s254, 1
      %s256 = scalar_select %p253, %s254, %s255
      %p259 = pneg %p253
      %p260 = scmp.eq.s32.totalorder %s19, 1
      %p261 = por %p259, %p260
      %p262 = scmp.ne.s32.totalorder %s254, %s257
      %p263 = scmp.eq.s32.totalorder %s19, 0
      %p264 = por %p262, %p263
      %p265 = scmp.ne.s32.totalorder %s254, %s257
      %p266 = scmp.eq.s32.totalorder %s24, 1
      %p267 = por %p265, %p266
      %p268 = scmp.ne.s32.totalorder %s257, %s258
      %p269 = scmp.eq.s32.totalorder %s24, 0
      %p270 = por %p268, %p269
      %p271 = scmp.ne.s32.totalorder %s257, %s258
      %p272 = scmp.eq.s32.totalorder %s25, 1
      %p273 = por %p271, %p272
      %p275 = scmp.ne.s32.totalorder %s258, %s274
      %p276 = scmp.eq.s32.totalorder %s25, 0
      %p277 = por %p275, %p276
      %p278 = scmp.le.s32.totalorder 1, %s19
      %p279 = scmp.lt.s32.totalorder %s19, 3
      %p280 = pnand %p278, %p279
      %p281 = pneg %p280
      // Predicated region
      $region9: #{tpu_custom_call.1} parent=5 // pred_check
        _
      $region10: #{tpu_custom_call.1} parent=5 // pred_check_branch
        %283 = sbr.rel (%p280) target = $region12
      $region11: #{tpu_custom_call.1} parent=5 // pred_region
        %s284 = ssub.s32 %s19, 1
        // Predicated region
        $region13: #{tpu_custom_call.1} parent=11 // pred_check
          %p285 = pneg %p92
        $region14: #{tpu_custom_call.1} parent=11 // pred_check_branch
          %287 = sbr.rel (%p285) target = $region16
        $region15: #{tpu_custom_call.1} parent=11 // pred_region
          _
        $region16: #{tpu_custom_call.1} parent=11 // pred_fallthru
          _
        // Predicated region
        $region17: #{tpu_custom_call.1} parent=11 // pred_check
          %p288 = pneg %p113
        $region18: #{tpu_custom_call.1} parent=11 // pred_check_branch
          %290 = sbr.rel (%p288) target = $region20
        $region19: #{tpu_custom_call.1} parent=11 // pred_region
          _
        $region20: #{tpu_custom_call.1} parent=11 // pred_fallthru
          _
        // Predicated region
        $region21: #{tpu_custom_call.1} parent=11 // pred_check
          %p291 = pneg %p134
        $region22: #{tpu_custom_call.1} parent=11 // pred_check_branch
          %293 = sbr.rel (%p291) target = $region24
        $region23: #{tpu_custom_call.1} parent=11 // pred_region
          _
        $region24: #{tpu_custom_call.1} parent=11 // pred_fallthru
          _
        // Predicated region
        $region25: #{tpu_custom_call.1} parent=11 // pred_check
          %p294 = pneg %p155
        $region26: #{tpu_custom_call.1} parent=11 // pred_check_branch
          %296 = sbr.rel (%p294) target = $region28
        $region27: #{tpu_custom_call.1} parent=11 // pred_region
          _
        $region28: #{tpu_custom_call.1} parent=11 // pred_fallthru
          _
        // Predicated region
        $region29: #{tpu_custom_call.1} parent=11 // pred_check
          %p297 = pneg %p176
        $region30: #{tpu_custom_call.1} parent=11 // pred_check_branch
          %299 = sbr.rel (%p297) target = $region32
        $region31: #{tpu_custom_call.1} parent=11 // pred_region
          _
        $region32: #{tpu_custom_call.1} parent=11 // pred_fallthru
          _
        // Predicated region
        $region33: #{tpu_custom_call.1} parent=11 // pred_check
          %p300 = pneg %p223
        $region34: #{tpu_custom_call.1} parent=11 // pred_check_branch
          %302 = sbr.rel (%p300) target = $region36
        $region35: #{tpu_custom_call.1} parent=11 // pred_region
          _
        $region36: #{tpu_custom_call.1} parent=11 // pred_fallthru
          _
        // Predicated region
        $region37: #{tpu_custom_call.1} parent=11 // pred_check
          %p303 = pneg %p244
        $region38: #{tpu_custom_call.1} parent=11 // pred_check_branch
          %305 = sbr.rel (%p303) target = $region40
        $region39: #{tpu_custom_call.1} parent=11 // pred_region
          _
        $region40: #{tpu_custom_call.1} parent=11 // pred_fallthru
          _
      $region12: #{tpu_custom_call.1} parent=5 // pred_fallthru
        _
      %p306 = scmp.lt.s32.totalorder %s19, 2
      // Predicated region
      $region41: #{tpu_custom_call.1} parent=5 // pred_check
        %p307 = pneg %p306
      $region42: #{tpu_custom_call.1} parent=5 // pred_check_branch
        %309 = sbr.rel (%p307) target = $region44
      $region43: #{tpu_custom_call.1} parent=5 // pred_region
        // Predicated region
        $region45: #{tpu_custom_call.1} parent=43 // pred_check
          %p310 = pneg %p39
        $region46: #{tpu_custom_call.1} parent=43 // pred_check_branch
          %312 = sbr.rel (%p310) target = $region48
        $region47: #{tpu_custom_call.1} parent=43 // pred_region
          %s313 = smul.u32 2, %s19
          %p314 = scmp.lt.s32.totalorder %s313, 3
          %s315 = scalar_select %p314, %s313, 3
          %s316 = smul.addr %s315, 6
          %s317 = smul.addr %s316, 8
          %s318 = scalar_lea.vmem %s0, %s317
          %s319 = smul.u32 2, %s19
        $region48: #{tpu_custom_call.1} parent=43 // pred_fallthru
          _
        // Predicated region
        $region49: #{tpu_custom_call.1} parent=43 // pred_check
          %p320 = pneg %p65
        $region50: #{tpu_custom_call.1} parent=43 // pred_check_branch
          %322 = sbr.rel (%p320) target = $region52
        $region51: #{tpu_custom_call.1} parent=43 // pred_region
          %s323 = smul.u32 2, %s19
          %p324 = scmp.lt.s32.totalorder %s323, 3
          %s325 = scalar_select %p324, %s323, 3
          %s326 = smul.addr %s325, 6
          %s327 = smul.addr %s326, 8
          %s328 = scalar_lea.vmem %s1, %s327
          %s329 = smul.u32 2, %s19
        $region52: #{tpu_custom_call.1} parent=43 // pred_fallthru
          _
        // Predicated region
        $region53: #{tpu_custom_call.1} parent=43 // pred_check
          %p330 = pneg %p196
        $region54: #{tpu_custom_call.1} parent=43 // pred_check_branch
          %332 = sbr.rel (%p330) target = $region56
        $region55: #{tpu_custom_call.1} parent=43 // pred_region
          %s333 = smul.u32 2, %s19
          %p334 = scmp.lt.s32.totalorder %s333, 3
          %s335 = scalar_select %p334, %s333, 3
          %s336 = smul.addr %s335, 4
          %s337 = smul.addr %s336, 8
          %s338 = scalar_lea.vmem %s7, %s337
          %s339 = smul.u32 2, %s19
        $region56: #{tpu_custom_call.1} parent=43 // pred_fallthru
          _
      $region44: #{tpu_custom_call.1} parent=5 // pred_fallthru
        _
      %p340 = scmp.le.s32.totalorder 1, %s19
      %p341 = scmp.lt.s32.totalorder %s19, 3
      %p342 = pnand %p340, %p341
      %p343 = pneg %p342
      // Predicated region
      $region57: #{tpu_custom_call.1} parent=5 // pred_check
        _
      $region58: #{tpu_custom_call.1} parent=5 // pred_check_branch
        %345 = sbr.rel (%p342) target = $region60
      $region59: #{tpu_custom_call.1} parent=5 // pred_region
        %s346 = ssub.s32 %s19, 1
        %s347 = smul.u32 2, %s24
        %p348 = scmp.lt.s32.totalorder %s347, 3
        %s349 = scalar_select %p348, %s347, 3
        %s350 = smul.addr %s349, 6
        %s351 = smul.addr %s350, 8
        %s352 = scalar_lea.vmem %s0, %s351
        %p353 = pneg %p45
        %p354 = pneg %p42
        %s355 = smul.u32 2, %s24
        %p356 = scmp.lt.s32.totalorder %s355, 3
        %s357 = scalar_select %p356, %s355, 3
        %s358 = smul.addr %s357, 6
        %s359 = smul.addr %s358, 8
        %s360 = scalar_lea.vmem %s1, %s359
        %p361 = pneg %p71
        %p362 = pneg %p68
        %p363 = pneg %p92
        %p364 = pneg %p89
        %p365 = pneg %p113
        %p366 = pneg %p110
        %p367 = pneg %p134
        %p368 = pneg %p131
        %p369 = pneg %p155
        %p370 = pneg %p152
        %p371 = pneg %p176
        %p372 = pneg %p173
        %s373 = smul.u32 2, %s24
        %p374 = scmp.lt.s32.totalorder %s373, 3
        %s375 = scalar_select %p374, %s373, 3
        %s376 = smul.addr %s375, 4
        %s377 = smul.addr %s376, 8
        %s378 = scalar_lea.vmem %s7, %s377
        %p379 = pneg %p202
        %p380 = pneg %p199
        %p381 = pneg %p223
        %p382 = pneg %p220
        %p383 = pneg %p244
        %p384 = pneg %p241
        %p385 = pneg %p270
        %p386 = pneg %p267
        %s387 = sand.u32 %s257, 1
        %s388 = scalar_lea.sflag [#allocation3], %s387
        %s389 = sand.u32 %s257, 1
        %s390 = smul.addr %s389, 64
        %s391 = scalar_lea.vmem [#allocation2], %s390
        %s392 = smul.u32 2, %s24
        %p393 = scmp.lt.s32.totalorder %s392, 3
        %s394 = scalar_select %p393, %s392, 3
        %s395 = smul.addr %s394, 6
        %s396 = smul.addr %s395, 8
        %s397 = scalar_lea.vmem %s0, %s396
        %s398 = smul.u32 2, %s24
        %s399 = smul.u32 2, %s24
        %p400 = scmp.lt.s32.totalorder %s399, 3
        %s401 = scalar_select %p400, %s399, 3
        %s402 = smul.addr %s401, 6
        %s403 = smul.addr %s402, 8
        %s404 = scalar_lea.vmem %s1, %s403
        %s405 = smul.u32 2, %s24
        %s406 = smul.u32 2, %s24
        %p407 = scmp.lt.s32.totalorder %s406, 3
        %s408 = scalar_select %p407, %s406, 3
        %s409 = smul.addr %s408, 4
        %s410 = smul.addr %s409, 8
        %s411 = scalar_lea.vmem %s7, %s410
        %s412 = smul.u32 2, %s24
        %s413 = smul.u32 2, %s24
        %v415 = vld [vmem:[%s2] sm:$0xff]
        %v416 = vld [vmem:[%s2 + $0x8] sm:$0xff]
        %v417 = vld [vmem:[%s2 + $0x10] sm:$0xff]
        %v418 = vld [vmem:[%s2 + $0x18] sm:$0xff]
        %v419 = vld [vmem:[%s2 + $0x20] sm:$0xff]
        %v420 = vld [vmem:[%s2 + $0x28] sm:$0xff]
        %v421 = vld [vmem:[%s2 + $0x30] sm:$0xff]
        %v422 = vld [vmem:[%s2 + $0x38] sm:$0xff]
        %v423 = vld [vmem:[%s2 + $0x40] sm:$0xff]
        %v424 = vld [vmem:[%s3] sm:$0xff]
        %v425 = vld [vmem:[%s3 + $0x8] sm:$0xff]
        %s426 = scalar_lea.vmem %s3, 16
        %v427 = vld [vmem:[%s426] sm:$0xff]
        %v428 = vld [vmem:[%s426 + $0x8] sm:$0xff]
        %s429 = scalar_lea.vmem %s3, 32
        %v430 = vld [vmem:[%s429] sm:$0xff]
        %v431 = vld [vmem:[%s429 + $0x8] sm:$0xff]
        %v432 = vld [vmem:[%s4] sm:$0xff]
        %v433 = vld [vmem:[%s5] sm:$0xff]
        %v434 = vld [vmem:[%s6] sm:$0xff]
        %v435 = vld [vmem:[%s8] sm:$0xf]
        %v436 = vld [vmem:[%s8 + $0x4] sm:$0xf]
        %v437 = vld [vmem:[%s8 + $0x8] sm:$0xf]
        %v438 = vld [vmem:[%s8 + $0xc] sm:$0xf]
        %v439 = vld [vmem:[%s9] sm:$0xff]
        %v440 = vld [vmem:[%s9 + $0x8] sm:$0xff]
        %v441 = vld [vmem:[%s9 + $0x10] sm:$0xff]
        %v442 = vld [vmem:[%s9 + $0x18] sm:$0xff]
        %v443 = vld [vmem:[%s397] sm:$0xff]
        %v444 = vld [vmem:[%s397 + $0x8] sm:$0xff]
        %v445 = vld [vmem:[%s397 + $0x10] sm:$0xff]
        %v446 = vld [vmem:[%s397 + $0x18] sm:$0xff]
        %v447 = vld [vmem:[%s397 + $0x20] sm:$0xff]
        %v448 = vld [vmem:[%s397 + $0x28] sm:$0xff]
        %v449 = vld [vmem:[%s404] sm:$0xff]
        %v450 = vld [vmem:[%s404 + $0x8] sm:$0xff]
        %v451 = vld [vmem:[%s404 + $0x10] sm:$0xff]
        %v452 = vld [vmem:[%s404 + $0x18] sm:$0xff]
        %v453 = vld [vmem:[%s404 + $0x20] sm:$0xff]
        %v454 = vld [vmem:[%s404 + $0x28] sm:$0xff]
        %v455 = vsub.f32 %v443, %v449
        %v456 = vsub.f32 %v444, %v450
        %v457 = vsub.f32 %v445, %v451
        %v458 = vsub.f32 %v446, %v452
        %v459 = vsub.f32 %v447, %v453
        %v460 = vsub.f32 %v448, %v454
        %v461 = vand.u32 2147483647, %v455
        %v462 = vand.u32 2147483647, %v456
        %v463 = vand.u32 2147483647, %v457
        %v464 = vand.u32 2147483647, %v458
        %v465 = vand.u32 2147483647, %v459
        %v466 = vand.u32 2147483647, %v460
        %vm467 = vcmask 392192
        %v469 = vsel %vm467, %v415, 0
        %v472 = vsel %vm467, %v416, 0
        %v475 = vsel %vm467, %v417, 0
        %v478 = vsel %vm467, %v418, 0
        %v481 = vsel %vm467, %v419, 0
        %v484 = vsel %vm467, %v420, 0
        %v487 = vsel %vm467, %v421, 0
        %v490 = vsel %vm467, %v422, 0
        %v493 = vsel %vm467, %v423, 0
        %495 = vmatprep.subr.mxu0 0.0
        %496 = vmatpush1.msra.mxu0 0.0
        %497 = vmatprep.subr.mxu0 0.0
        %498 = vmatpush1.msra.mxu0 0.0
        %499 = vmatprep.subr.mxu0 0.0
        %500 = vmatpush1.msra.mxu0 0.0
        %501 = vmatprep.subr.mxu0 0.0
        %502 = vmatpush1.msra.mxu0 0.0
        %503 = vmatprep.subr.mxu0 0.0
        %504 = vmatpush1.msra.mxu0 0.0
        %505 = vmatprep.subr.mxu0 0.0
        %506 = vmatpush1.msra.mxu0 0.0
        %507 = vmatprep.subr.mxu0 0.0
        %508 = vmatpush1.msra.mxu0 0.0
        %509 = vmatprep.subr.mxu0 0.0
        %510 = vmatpush1.msra.mxu0 0.0
        %511 = vmatprep.subr.mxu0 0.0
        %512 = vmatpush1.msra.mxu0 0.0
        %513 = vmatprep.subr.mxu0 0.0
        %514 = vmatpush1.msra.mxu0 0.0
        %515 = vmatprep.subr.mxu0 0.0
        %516 = vmatpush1.msra.mxu0 %v466
        %517 = vmatprep.subr.mxu0 0.0
        %518 = vmatpush1.msra.mxu0 %v465
        %519 = vmatprep.subr.mxu0 0.0
        %520 = vmatpush1.msra.mxu0 %v464
        %521 = vmatprep.subr.mxu0 0.0
        %522 = vmatpush1.msra.mxu0 %v463
        %523 = vmatprep.subr.mxu0 0.0
        %524 = vmatpush1.msra.mxu0 %v462
        %525 = vmatprep.subr.mxu0 0.0
        %526 = vmatpush1.msra.mxu0 %v461
        %527 = vmatprep.subr.mxu0 0.0
        %528 = vmatpush2.msra.mxu0 0.0
        %529 = vmatprep.subr.mxu0 0.0
        %530 = vmatpush2.msra.mxu0 0.0
        %531 = vmatprep.subr.mxu0 0.0
        %532 = vmatpush2.msra.mxu0 0.0
        %533 = vmatprep.subr.mxu0 0.0
        %534 = vmatpush2.msra.mxu0 0.0
        %535 = vmatprep.subr.mxu0 0.0
        %536 = vmatpush2.msra.mxu0 0.0
        %537 = vmatprep.subr.mxu0 0.0
        %538 = vmatpush2.msra.mxu0 0.0
        %539 = vmatprep.subr.mxu0 0.0
        %540 = vmatpush2.msra.mxu0 0.0
        %541 = vmatprep.subr.mxu0 0.0
        %542 = vmatpush2.msra.mxu0 0.0
        %543 = vmatprep.subr.mxu0 0.0
        %544 = vmatpush2.msra.mxu0 0.0
        %545 = vmatprep.subr.mxu0 0.0
        %546 = vmatpush2.msra.mxu0 0.0
        %547 = vmatprep.subr.mxu0 0.0
        %548 = vmatpush2.msra.mxu0 0.0
        %549 = vmatprep.subr.mxu0 0.0
        %550 = vmatpush2.msra.mxu0 0.0
        %551 = vmatprep.subr.mxu0 0.0
        %552 = vmatpush2.msra.mxu0 0.0
        %553 = vmatprep.subr.mxu0 0.0
        %554 = vmatpush2.msra.mxu0 0.0
        %555 = vmatprep.subr.mxu0 0.0
        %556 = vmatpush2.msra.mxu0 0.0
        %557 = vmatprep.subr.mxu0 0.0
        %558 = vmatpush2.msra.mxu0 0.0
        %559 = vmatprep.mubr.f32.mxu0 0.0
        %560 = vmatmul.mubr.f32.gmra.mxu0 %v469
        %v561 = vpop.f32.mrf.mxu0
        %v562 = vadd.f32 0.0, %v561
        %v563 = vpop.f32.mrf.mxu0
        %564 = vmatprep.mubr.f32.mxu0 0.0
        %565 = vmatmul.mubr.f32.gmra.mxu0 %v472
        %v566 = vpop.f32.mrf.mxu0
        %v567 = vadd.f32 0.0, %v566
        %v568 = vpop.f32.mrf.mxu0
        %569 = vmatprep.mubr.f32.mxu0 0.0
        %570 = vmatmul.mubr.f32.gmra.mxu0 %v475
        %v571 = vpop.f32.mrf.mxu0
        %v572 = vadd.f32 0.0, %v571
        %v573 = vpop.f32.mrf.mxu0
        %574 = vmatprep.mubr.f32.mxu0 0.0
        %575 = vmatmul.mubr.f32.gmra.mxu0 %v478
        %v576 = vpop.f32.mrf.mxu0
        %v577 = vadd.f32 0.0, %v576
        %v578 = vpop.f32.mrf.mxu0
        %579 = vmatprep.mubr.f32.mxu0 0.0
        %580 = vmatmul.mubr.f32.gmra.mxu0 %v481
        %v581 = vpop.f32.mrf.mxu0
        %v582 = vadd.f32 0.0, %v581
        %v583 = vpop.f32.mrf.mxu0
        %584 = vmatprep.mubr.f32.mxu0 0.0
        %585 = vmatmul.mubr.f32.gmra.mxu0 %v484
        %v586 = vpop.f32.mrf.mxu0
        %v587 = vadd.f32 0.0, %v586
        %v588 = vpop.f32.mrf.mxu0
        %589 = vmatprep.mubr.f32.mxu0 0.0
        %590 = vmatmul.mubr.f32.gmra.mxu0 %v487
        %v591 = vpop.f32.mrf.mxu0
        %v592 = vadd.f32 0.0, %v591
        %v593 = vpop.f32.mrf.mxu0
        %594 = vmatprep.mubr.f32.mxu0 0.0
        %595 = vmatmul.mubr.f32.gmra.mxu0 %v490
        %v596 = vpop.f32.mrf.mxu0
        %v597 = vadd.f32 0.0, %v596
        %v598 = vpop.f32.mrf.mxu0
        %599 = vmatprep.mubr.f32.mxu0 0.0
        %600 = vmatmul.mubr.f32.gmra.mxu0 %v493
        %v601 = vpop.f32.mrf.mxu0
        %v602 = vadd.f32 0.0, %v601
        %v603 = vpop.f32.mrf.mxu0
        %604 = vdwg.mxu0
        %vm605 = vcmask 130048
        %v607 = vsel %vm605, %v577, 0
        %v610 = vsel %vm605, %v582, 0
        %v613 = vsel %vm605, %v587, 0
        %615 = vmatprep.subr.mxu0 0.0
        %616 = vmatpush1.msra.mxu0 0.0
        %617 = vmatprep.subr.mxu0 0.0
        %618 = vmatpush1.msra.mxu0 0.0
        %619 = vmatprep.subr.mxu0 0.0
        %620 = vmatpush1.msra.mxu0 0.0
        %621 = vmatprep.subr.mxu0 0.0
        %622 = vmatpush1.msra.mxu0 0.0
        %623 = vmatprep.subr.mxu0 0.0
        %624 = vmatpush1.msra.mxu0 0.0
        %625 = vmatprep.subr.mxu0 0.0
        %626 = vmatpush1.msra.mxu0 0.0
        %627 = vmatprep.subr.mxu0 0.0
        %628 = vmatpush1.msra.mxu0 0.0
        %629 = vmatprep.subr.mxu0 0.0
        %630 = vmatpush1.msra.mxu0 0.0
        %631 = vmatprep.subr.mxu0 0.0
        %632 = vmatpush1.msra.mxu0 0.0
        %633 = vmatprep.subr.mxu0 0.0
        %634 = vmatpush1.msra.mxu0 0.0
        %635 = vmatprep.subr.mxu0 0.0
        %636 = vmatpush1.msra.mxu0 0.0
        %637 = vmatprep.subr.mxu0 0.0
        %638 = vmatpush1.msra.mxu0 0.0
        %639 = vmatprep.subr.mxu0 0.0
        %640 = vmatpush1.msra.mxu0 0.0
        %641 = vmatprep.subr.mxu0 0.0
        %642 = vmatpush1.msra.mxu0 0.0
        %643 = vmatprep.subr.mxu0 0.0
        %644 = vmatpush1.msra.mxu0 %v428
        %645 = vmatprep.subr.mxu0 0.0
        %646 = vmatpush1.msra.mxu0 %v427
        %647 = vmatprep.subr.mxu0 0.0
        %648 = vmatpush2.msra.mxu0 0.0
        %649 = vmatprep.subr.mxu0 0.0
        %650 = vmatpush2.msra.mxu0 0.0
        %651 = vmatprep.subr.mxu0 0.0
        %652 = vmatpush2.msra.mxu0 0.0
        %653 = vmatprep.subr.mxu0 0.0
        %654 = vmatpush2.msra.mxu0 0.0
        %655 = vmatprep.subr.mxu0 0.0
        %656 = vmatpush2.msra.mxu0 0.0
        %657 = vmatprep.subr.mxu0 0.0
        %658 = vmatpush2.msra.mxu0 0.0
        %659 = vmatprep.subr.mxu0 0.0
        %660 = vmatpush2.msra.mxu0 0.0
        %661 = vmatprep.subr.mxu0 0.0
        %662 = vmatpush2.msra.mxu0 0.0
        %663 = vmatprep.subr.mxu0 0.0
        %664 = vmatpush2.msra.mxu0 0.0
        %665 = vmatprep.subr.mxu0 0.0
        %666 = vmatpush2.msra.mxu0 0.0
        %667 = vmatprep.subr.mxu0 0.0
        %668 = vmatpush2.msra.mxu0 0.0
        %669 = vmatprep.subr.mxu0 0.0
        %670 = vmatpush2.msra.mxu0 0.0
        %671 = vmatprep.subr.mxu0 0.0
        %672 = vmatpush2.msra.mxu0 0.0
        %673 = vmatprep.subr.mxu0 0.0
        %674 = vmatpush2.msra.mxu0 0.0
        %675 = vmatprep.subr.mxu0 0.0
        %676 = vmatpush2.msra.mxu0 0.0
        %677 = vmatprep.subr.mxu0 0.0
        %678 = vmatpush2.msra.mxu0 0.0
        %679 = vmatprep.mubr.f32.mxu0 0.0
        %680 = vmatmul.mubr.f32.gmra.mxu0 %v607
        %v681 = vpop.f32.mrf.mxu0
        %v682 = vadd.f32 0.0, %v681
        %v683 = vpop.f32.mrf.mxu0
        %684 = vmatprep.mubr.f32.mxu0 0.0
        %685 = vmatmul.mubr.f32.gmra.mxu0 %v610
        %v686 = vpop.f32.mrf.mxu0
        %v687 = vadd.f32 0.0, %v686
        %v688 = vpop.f32.mrf.mxu0
        %689 = vmatprep.mubr.f32.mxu0 0.0
        %690 = vmatmul.mubr.f32.gmra.mxu0 %v613
        %v691 = vpop.f32.mrf.mxu0
        %v692 = vadd.f32 0.0, %v691
        %v693 = vpop.f32.mrf.mxu0
        %694 = vdwg.mxu0
        %v696 = vsel %vm605, %v562, 0
        %v699 = vsel %vm605, %v567, 0
        %v702 = vsel %vm605, %v572, 0
        %704 = vmatprep.subr.mxu0 0.0
        %705 = vmatpush1.msra.mxu0 0.0
        %706 = vmatprep.subr.mxu0 0.0
        %707 = vmatpush1.msra.mxu0 0.0
        %708 = vmatprep.subr.mxu0 0.0
        %709 = vmatpush1.msra.mxu0 0.0
        %710 = vmatprep.subr.mxu0 0.0
        %711 = vmatpush1.msra.mxu0 0.0
        %712 = vmatprep.subr.mxu0 0.0
        %713 = vmatpush1.msra.mxu0 0.0
        %714 = vmatprep.subr.mxu0 0.0
        %715 = vmatpush1.msra.mxu0 0.0
        %716 = vmatprep.subr.mxu0 0.0
        %717 = vmatpush1.msra.mxu0 0.0
        %718 = vmatprep.subr.mxu0 0.0
        %719 = vmatpush1.msra.mxu0 0.0
        %720 = vmatprep.subr.mxu0 0.0
        %721 = vmatpush1.msra.mxu0 0.0
        %722 = vmatprep.subr.mxu0 0.0
        %723 = vmatpush1.msra.mxu0 0.0
        %724 = vmatprep.subr.mxu0 0.0
        %725 = vmatpush1.msra.mxu0 0.0
        %726 = vmatprep.subr.mxu0 0.0
        %727 = vmatpush1.msra.mxu0 0.0
        %728 = vmatprep.subr.mxu0 0.0
        %729 = vmatpush1.msra.mxu0 0.0
        %730 = vmatprep.subr.mxu0 0.0
        %731 = vmatpush1.msra.mxu0 0.0
        %732 = vmatprep.subr.mxu0 0.0
        %733 = vmatpush1.msra.mxu0 %v425
        %734 = vmatprep.subr.mxu0 0.0
        %735 = vmatpush1.msra.mxu0 %v424
        %736 = vmatprep.subr.mxu0 0.0
        %737 = vmatpush2.msra.mxu0 0.0
        %738 = vmatprep.subr.mxu0 0.0
        %739 = vmatpush2.msra.mxu0 0.0
        %740 = vmatprep.subr.mxu0 0.0
        %741 = vmatpush2.msra.mxu0 0.0
        %742 = vmatprep.subr.mxu0 0.0
        %743 = vmatpush2.msra.mxu0 0.0
        %744 = vmatprep.subr.mxu0 0.0
        %745 = vmatpush2.msra.mxu0 0.0
        %746 = vmatprep.subr.mxu0 0.0
        %747 = vmatpush2.msra.mxu0 0.0
        %748 = vmatprep.subr.mxu0 0.0
        %749 = vmatpush2.msra.mxu0 0.0
        %750 = vmatprep.subr.mxu0 0.0
        %751 = vmatpush2.msra.mxu0 0.0
        %752 = vmatprep.subr.mxu0 0.0
        %753 = vmatpush2.msra.mxu0 0.0
        %754 = vmatprep.subr.mxu0 0.0
        %755 = vmatpush2.msra.mxu0 0.0
        %756 = vmatprep.subr.mxu0 0.0
        %757 = vmatpush2.msra.mxu0 0.0
        %758 = vmatprep.subr.mxu0 0.0
        %759 = vmatpush2.msra.mxu0 0.0
        %760 = vmatprep.subr.mxu0 0.0
        %761 = vmatpush2.msra.mxu0 0.0
        %762 = vmatprep.subr.mxu0 0.0
        %763 = vmatpush2.msra.mxu0 0.0
        %764 = vmatprep.subr.mxu0 0.0
        %765 = vmatpush2.msra.mxu0 0.0
        %766 = vmatprep.subr.mxu0 0.0
        %767 = vmatpush2.msra.mxu0 0.0
        %768 = vmatprep.mubr.f32.mxu0 0.0
        %769 = vmatmul.mubr.f32.gmra.mxu0 %v696
        %v770 = vpop.f32.mrf.mxu0
        %v771 = vadd.f32 %v682, %v770
        %v772 = vpop.f32.mrf.mxu0
        %773 = vmatprep.mubr.f32.mxu0 0.0
        %774 = vmatmul.mubr.f32.gmra.mxu0 %v699
        %v775 = vpop.f32.mrf.mxu0
        %v776 = vadd.f32 %v687, %v775
        %v777 = vpop.f32.mrf.mxu0
        %778 = vmatprep.mubr.f32.mxu0 0.0
        %779 = vmatmul.mubr.f32.gmra.mxu0 %v702
        %v780 = vpop.f32.mrf.mxu0
        %v781 = vadd.f32 %v692, %v780
        %v782 = vpop.f32.mrf.mxu0
        %783 = vdwg.mxu0
        %v785 = vsel %vm605, %v592, 0
        %v788 = vsel %vm605, %v597, 0
        %v791 = vsel %vm605, %v602, 0
        %793 = vmatprep.subr.mxu0 0.0
        %794 = vmatpush1.msra.mxu0 0.0
        %795 = vmatprep.subr.mxu0 0.0
        %796 = vmatpush1.msra.mxu0 0.0
        %797 = vmatprep.subr.mxu0 0.0
        %798 = vmatpush1.msra.mxu0 0.0
        %799 = vmatprep.subr.mxu0 0.0
        %800 = vmatpush1.msra.mxu0 0.0
        %801 = vmatprep.subr.mxu0 0.0
        %802 = vmatpush1.msra.mxu0 0.0
        %803 = vmatprep.subr.mxu0 0.0
        %804 = vmatpush1.msra.mxu0 0.0
        %805 = vmatprep.subr.mxu0 0.0
        %806 = vmatpush1.msra.mxu0 0.0
        %807 = vmatprep.subr.mxu0 0.0
        %808 = vmatpush1.msra.mxu0 0.0
        %809 = vmatprep.subr.mxu0 0.0
        %810 = vmatpush1.msra.mxu0 0.0
        %811 = vmatprep.subr.mxu0 0.0
        %812 = vmatpush1.msra.mxu0 0.0
        %813 = vmatprep.subr.mxu0 0.0
        %814 = vmatpush1.msra.mxu0 0.0
        %815 = vmatprep.subr.mxu0 0.0
        %816 = vmatpush1.msra.mxu0 0.0
        %817 = vmatprep.subr.mxu0 0.0
        %818 = vmatpush1.msra.mxu0 0.0
        %819 = vmatprep.subr.mxu0 0.0
        %820 = vmatpush1.msra.mxu0 0.0
        %821 = vmatprep.subr.mxu0 0.0
        %822 = vmatpush1.msra.mxu0 %v431
        %823 = vmatprep.subr.mxu0 0.0
        %824 = vmatpush1.msra.mxu0 %v430
        %825 = vmatprep.subr.mxu0 0.0
        %826 = vmatpush2.msra.mxu0 0.0
        %827 = vmatprep.subr.mxu0 0.0
        %828 = vmatpush2.msra.mxu0 0.0
        %829 = vmatprep.subr.mxu0 0.0
        %830 = vmatpush2.msra.mxu0 0.0
        %831 = vmatprep.subr.mxu0 0.0
        %832 = vmatpush2.msra.mxu0 0.0
        %833 = vmatprep.subr.mxu0 0.0
        %834 = vmatpush2.msra.mxu0 0.0
        %835 = vmatprep.subr.mxu0 0.0
        %836 = vmatpush2.msra.mxu0 0.0
        %837 = vmatprep.subr.mxu0 0.0
        %838 = vmatpush2.msra.mxu0 0.0
        %839 = vmatprep.subr.mxu0 0.0
        %840 = vmatpush2.msra.mxu0 0.0
        %841 = vmatprep.subr.mxu0 0.0
        %842 = vmatpush2.msra.mxu0 0.0
        %843 = vmatprep.subr.mxu0 0.0
        %844 = vmatpush2.msra.mxu0 0.0
        %845 = vmatprep.subr.mxu0 0.0
        %846 = vmatpush2.msra.mxu0 0.0
        %847 = vmatprep.subr.mxu0 0.0
        %848 = vmatpush2.msra.mxu0 0.0
        %849 = vmatprep.subr.mxu0 0.0
        %850 = vmatpush2.msra.mxu0 0.0
        %851 = vmatprep.subr.mxu0 0.0
        %852 = vmatpush2.msra.mxu0 0.0
        %853 = vmatprep.subr.mxu0 0.0
        %854 = vmatpush2.msra.mxu0 0.0
        %855 = vmatprep.subr.mxu0 0.0
        %856 = vmatpush2.msra.mxu0 0.0
        %857 = vmatprep.mubr.f32.mxu0 0.0
        %858 = vmatmul.mubr.f32.gmra.mxu0 %v785
        %v859 = vpop.f32.mrf.mxu0
        %v860 = vadd.f32 0.0, %v859
        %v861 = vpop.f32.mrf.mxu0
        %862 = vmatprep.mubr.f32.mxu0 0.0
        %863 = vmatmul.mubr.f32.gmra.mxu0 %v788
        %v864 = vpop.f32.mrf.mxu0
        %v865 = vadd.f32 0.0, %v864
        %v866 = vpop.f32.mrf.mxu0
        %867 = vmatprep.mubr.f32.mxu0 0.0
        %868 = vmatmul.mubr.f32.gmra.mxu0 %v791
        %v869 = vpop.f32.mrf.mxu0
        %v870 = vadd.f32 0.0, %v869
        %v871 = vpop.f32.mrf.mxu0
        %872 = vdwg.mxu0
        %v873 = vadd.f32 %v771, %v860
        %v874 = vadd.f32 %v776, %v865
        %v875 = vadd.f32 %v781, %v870
        %v876 = vmax.f32 %v873, 0.0
        %v877 = vmax.f32 %v874, 0.0
        %v878 = vmax.f32 %v875, 0.0
        %vm879 = vcmask 195584
        %v881 = vsel %vm879, %v432, 0
        %883 = vmatprep.subr.mxu0 0.0
        %884 = vmatpush1.msra.mxu0 0.0
        %885 = vmatprep.subr.mxu0 0.0
        %886 = vmatpush1.msra.mxu0 0.0
        %887 = vmatprep.subr.mxu0 0.0
        %888 = vmatpush1.msra.mxu0 0.0
        %889 = vmatprep.subr.mxu0 0.0
        %890 = vmatpush1.msra.mxu0 0.0
        %891 = vmatprep.subr.mxu0 0.0
        %892 = vmatpush1.msra.mxu0 0.0
        %893 = vmatprep.subr.mxu0 0.0
        %894 = vmatpush1.msra.mxu0 0.0
        %895 = vmatprep.subr.mxu0 0.0
        %896 = vmatpush1.msra.mxu0 0.0
        %897 = vmatprep.subr.mxu0 0.0
        %898 = vmatpush1.msra.mxu0 0.0
        %899 = vmatprep.subr.mxu0 0.0
        %900 = vmatpush1.msra.mxu0 0.0
        %901 = vmatprep.subr.mxu0 0.0
        %902 = vmatpush1.msra.mxu0 0.0
        %903 = vmatprep.subr.mxu0 0.0
        %904 = vmatpush1.msra.mxu0 0.0
        %905 = vmatprep.subr.mxu0 0.0
        %906 = vmatpush1.msra.mxu0 0.0
        %907 = vmatprep.subr.mxu0 0.0
        %908 = vmatpush1.msra.mxu0 0.0
        %909 = vmatprep.subr.mxu0 0.0
        %910 = vmatpush1.msra.mxu0 %v878
        %911 = vmatprep.subr.mxu0 0.0
        %912 = vmatpush1.msra.mxu0 %v877
        %913 = vmatprep.subr.mxu0 0.0
        %914 = vmatpush1.msra.mxu0 %v876
        %915 = vmatprep.subr.mxu0 0.0
        %916 = vmatpush2.msra.mxu0 0.0
        %917 = vmatprep.subr.mxu0 0.0
        %918 = vmatpush2.msra.mxu0 0.0
        %919 = vmatprep.subr.mxu0 0.0
        %920 = vmatpush2.msra.mxu0 0.0
        %921 = vmatprep.subr.mxu0 0.0
        %922 = vmatpush2.msra.mxu0 0.0
        %923 = vmatprep.subr.mxu0 0.0
        %924 = vmatpush2.msra.mxu0 0.0
        %925 = vmatprep.subr.mxu0 0.0
        %926 = vmatpush2.msra.mxu0 0.0
        %927 = vmatprep.subr.mxu0 0.0
        %928 = vmatpush2.msra.mxu0 0.0
        %929 = vmatprep.subr.mxu0 0.0
        %930 = vmatpush2.msra.mxu0 0.0
        %931 = vmatprep.subr.mxu0 0.0
        %932 = vmatpush2.msra.mxu0 0.0
        %933 = vmatprep.subr.mxu0 0.0
        %934 = vmatpush2.msra.mxu0 0.0
        %935 = vmatprep.subr.mxu0 0.0
        %936 = vmatpush2.msra.mxu0 0.0
        %937 = vmatprep.subr.mxu0 0.0
        %938 = vmatpush2.msra.mxu0 0.0
        %939 = vmatprep.subr.mxu0 0.0
        %940 = vmatpush2.msra.mxu0 0.0
        %941 = vmatprep.subr.mxu0 0.0
        %942 = vmatpush2.msra.mxu0 0.0
        %943 = vmatprep.subr.mxu0 0.0
        %944 = vmatpush2.msra.mxu0 0.0
        %945 = vmatprep.subr.mxu0 0.0
        %946 = vmatpush2.msra.mxu0 0.0
        %947 = vmatprep.mubr.f32.mxu0 0.0
        %948 = vmatmul.mubr.f32.gmra.mxu0 %v881
        %v949 = vpop.f32.mrf.mxu0
        %v950 = vadd.f32 0.0, %v949
        %v951 = vpop.f32.mrf.mxu0
        %952 = vdwg.mxu0
        %v953 = vsub.f32 0.0, %v950
        %v954 = vmul.f32 %v953, 1.442695
        %v955 = vpow.pop %v954
        %v956 = vadd.f32 %v955, 1.0
        %v957 = vrcp.pop %v956
        %v958 = vmul.f32 1.0, %v957
        %vm959 = vcmask 64512
        %v961 = vsel %vm959, %v958, 0
        %963 = vmatprep.subr.mxu0 0.0
        %964 = vmatpush1.msra.mxu0 0.0
        %965 = vmatprep.subr.mxu0 0.0
        %966 = vmatpush1.msra.mxu0 0.0
        %967 = vmatprep.subr.mxu0 0.0
        %968 = vmatpush1.msra.mxu0 0.0
        %969 = vmatprep.subr.mxu0 0.0
        %970 = vmatpush1.msra.mxu0 0.0
        %971 = vmatprep.subr.mxu0 0.0
        %972 = vmatpush1.msra.mxu0 0.0
        %973 = vmatprep.subr.mxu0 0.0
        %974 = vmatpush1.msra.mxu0 0.0
        %975 = vmatprep.subr.mxu0 0.0
        %976 = vmatpush1.msra.mxu0 0.0
        %977 = vmatprep.subr.mxu0 0.0
        %978 = vmatpush1.msra.mxu0 0.0
        %979 = vmatprep.subr.mxu0 0.0
        %980 = vmatpush1.msra.mxu0 0.0
        %981 = vmatprep.subr.mxu0 0.0
        %982 = vmatpush1.msra.mxu0 0.0
        %983 = vmatprep.subr.mxu0 0.0
        %984 = vmatpush1.msra.mxu0 0.0
        %985 = vmatprep.subr.mxu0 0.0
        %986 = vmatpush1.msra.mxu0 0.0
        %987 = vmatprep.subr.mxu0 0.0
        %988 = vmatpush1.msra.mxu0 0.0
        %989 = vmatprep.subr.mxu0 0.0
        %990 = vmatpush1.msra.mxu0 0.0
        %991 = vmatprep.subr.mxu0 0.0
        %992 = vmatpush1.msra.mxu0 0.0
        %993 = vmatprep.subr.mxu0 0.0
        %994 = vmatpush1.msra.mxu0 %v433
        %995 = vmatprep.subr.mxu0 0.0
        %996 = vmatpush2.msra.mxu0 0.0
        %997 = vmatprep.subr.mxu0 0.0
        %998 = vmatpush2.msra.mxu0 0.0
        %999 = vmatprep.subr.mxu0 0.0
        %1000 = vmatpush2.msra.mxu0 0.0
        %1001 = vmatprep.subr.mxu0 0.0
        %1002 = vmatpush2.msra.mxu0 0.0
        %1003 = vmatprep.subr.mxu0 0.0
        %1004 = vmatpush2.msra.mxu0 0.0
        %1005 = vmatprep.subr.mxu0 0.0
        %1006 = vmatpush2.msra.mxu0 0.0
        %1007 = vmatprep.subr.mxu0 0.0
        %1008 = vmatpush2.msra.mxu0 0.0
        %1009 = vmatprep.subr.mxu0 0.0
        %1010 = vmatpush2.msra.mxu0 0.0
        %1011 = vmatprep.subr.mxu0 0.0
        %1012 = vmatpush2.msra.mxu0 0.0
        %1013 = vmatprep.subr.mxu0 0.0
        %1014 = vmatpush2.msra.mxu0 0.0
        %1015 = vmatprep.subr.mxu0 0.0
        %1016 = vmatpush2.msra.mxu0 0.0
        %1017 = vmatprep.subr.mxu0 0.0
        %1018 = vmatpush2.msra.mxu0 0.0
        %1019 = vmatprep.subr.mxu0 0.0
        %1020 = vmatpush2.msra.mxu0 0.0
        %1021 = vmatprep.subr.mxu0 0.0
        %1022 = vmatpush2.msra.mxu0 0.0
        %1023 = vmatprep.subr.mxu0 0.0
        %1024 = vmatpush2.msra.mxu0 0.0
        %1025 = vmatprep.subr.mxu0 0.0
        %1026 = vmatpush2.msra.mxu0 0.0
        %1027 = vmatprep.mubr.f32.mxu0 0.0
        %1028 = vmatmul.mubr.f32.gmra.mxu0 %v961
        %v1029 = vpop.f32.mrf.mxu0
        %v1030 = vadd.f32 0.0, %v1029
        %v1031 = vpop.f32.mrf.mxu0
        %1032 = vdwg.mxu0
        %v1033 = vmul.f32 %v1030, %v434
        %v1034 = vrot.slane %v1033, 4
        %v1035 = vadd.f32 %v1033, %v1034
        %v1036 = vrot.slane %v1035, 2
        %v1037 = vadd.f32 %v1035, %v1036
        %v1038 = vrot.slane %v1037, 1
        %v1039 = vadd.f32 %v1037, %v1038
        %v1040 = vld [vmem:[%s411] sm:$0xff]
        %v1041 = vld [vmem:[%s411 + $0x8] sm:$0xff]
        %v1042 = vld [vmem:[%s411 + $0x10] sm:$0xff]
        %v1043 = vld [vmem:[%s411 + $0x18] sm:$0xff]
        %v1044 = vpack.c.bf16 %v1041, %v1040
        %v1045 = vpack.c.bf16 %v1043, %v1042
        %1047 = vset.pattern.permute.xlu0 0
        %1048 = vperm.xlu0 %1047, %v439
        %v1049 = vpop.permute.xlu0 %1048
        %1052 = vset.pattern.permute.xlu0 0
        %1053 = vperm.xlu0 %1052, %v440
        %v1054 = vpop.permute.xlu0 %1053
        %1057 = vset.pattern.permute.xlu0 0
        %1058 = vperm.xlu0 %1057, %v441
        %v1059 = vpop.permute.xlu0 %1058
        %1062 = vset.pattern.permute.xlu0 0
        %1063 = vperm.xlu0 %1062, %v442
        %v1064 = vpop.permute.xlu0 %1063
        %v1070 = vunpack.c.l.b16 %v435
        %v1071 = vunpack.c.l.b16 %v436
        %v1072 = vunpack.c.l.b16 %v437
        %v1073 = vunpack.c.l.b16 %v438
        %v1074 = vpack.c.b16 %v1071, %v1070
        %v1075 = vpack.c.b16 %v1073, %v1072
        %vm1076 = vcmask 261120
        %v1078 = vsel %vm1076, %v1074, 0
        %v1081 = vsel %vm1076, %v1075, 0
        %1083 = vmatprep.subr.bf16.mxu0 0
        %1084 = vmatpush1.bf16.msra.mxu0 0
        %1085 = vmatprep.subr.bf16.mxu0 0
        %1086 = vmatpush1.bf16.msra.mxu0 0
        %1087 = vmatprep.subr.bf16.mxu0 0
        %1088 = vmatpush1.bf16.msra.mxu0 0
        %1089 = vmatprep.subr.bf16.mxu0 0
        %1090 = vmatpush1.bf16.msra.mxu0 0
        %1091 = vmatprep.subr.bf16.mxu0 0
        %1092 = vmatpush1.bf16.msra.mxu0 0
        %1093 = vmatprep.subr.bf16.mxu0 0
        %1094 = vmatpush1.bf16.msra.mxu0 0
        %1095 = vmatprep.subr.bf16.mxu0 0
        %1096 = vmatpush1.bf16.msra.mxu0 %v1045
        %1097 = vmatprep.subr.bf16.mxu0 0
        %1098 = vmatpush1.bf16.msra.mxu0 %v1044
        %1099 = vmatprep.subr.bf16.mxu0 0
        %1100 = vmatpush2.bf16.msra.mxu0 0
        %1101 = vmatprep.subr.bf16.mxu0 0
        %1102 = vmatpush2.bf16.msra.mxu0 0
        %1103 = vmatprep.subr.bf16.mxu0 0
        %1104 = vmatpush2.bf16.msra.mxu0 0
        %1105 = vmatprep.subr.bf16.mxu0 0
        %1106 = vmatpush2.bf16.msra.mxu0 0
        %1107 = vmatprep.subr.bf16.mxu0 0
        %1108 = vmatpush2.bf16.msra.mxu0 0
        %1109 = vmatprep.subr.bf16.mxu0 0
        %1110 = vmatpush2.bf16.msra.mxu0 0
        %1111 = vmatprep.subr.bf16.mxu0 0
        %1112 = vmatpush2.bf16.msra.mxu0 0
        %1113 = vmatprep.subr.bf16.mxu0 0
        %1114 = vmatpush2.bf16.msra.mxu0 0
        %1115 = vmatprep.mubr.bf16.mxu0 0
        %1116 = vmatmul.mubr.bf16.gmra.mxu0 %v1078
        %v1117 = vpop.f32.mrf.mxu0
        %v1118 = vadd.f32 %v1049, %v1117
        %v1119 = vpop.f32.mrf.mxu0
        %v1120 = vpop.f32.mrf.mxu0
        %v1121 = vadd.f32 %v1054, %v1120
        %v1122 = vpop.f32.mrf.mxu0
        %1123 = vmatprep.mubr.bf16.mxu0 0
        %1124 = vmatmul.mubr.bf16.gmra.mxu0 %v1081
        %v1125 = vpop.f32.mrf.mxu0
        %v1126 = vadd.f32 %v1059, %v1125
        %v1127 = vpop.f32.mrf.mxu0
        %v1128 = vpop.f32.mrf.mxu0
        %v1129 = vadd.f32 %v1064, %v1128
        %v1130 = vpop.f32.mrf.mxu0
        %1131 = vdwg.mxu0
        %v1132 = vmax.f32 %v1118, 0.0
        %v1133 = vmax.f32 %v1121, 0.0
        %v1134 = vmax.f32 %v1126, 0.0
        %v1135 = vmax.f32 %v1129, 0.0
        %v1136 = vmul.f32 %v1039, %v1132
        %v1137 = vmul.f32 %v1039, %v1133
        %v1138 = vmul.f32 %v1039, %v1134
        %v1139 = vmul.f32 %v1039, %v1135
        %v1140 = vadd.f32 %v1136, %v1040
        %v1141 = vadd.f32 %v1137, %v1041
        %v1142 = vadd.f32 %v1138, %v1042
        %v1143 = vadd.f32 %v1139, %v1043
        %1144 = vst [vmem:[%s391] sm:$0xff] %v1140
        %1145 = vst [vmem:[%s391 + $0x8] sm:$0xff] %v1141
        %1146 = vst [vmem:[%s391 + $0x10] sm:$0xff] %v1142
        %1147 = vst [vmem:[%s391 + $0x18] sm:$0xff] %v1143
        %s1148 = scalar_lea.vmem %s397, 48
        %v1149 = vld [vmem:[%s1148] sm:$0xff]
        %v1150 = vld [vmem:[%s1148 + $0x8] sm:$0xff]
        %v1151 = vld [vmem:[%s1148 + $0x10] sm:$0xff]
        %v1152 = vld [vmem:[%s1148 + $0x18] sm:$0xff]
        %v1153 = vld [vmem:[%s1148 + $0x20] sm:$0xff]
        %v1154 = vld [vmem:[%s1148 + $0x28] sm:$0xff]
        %s1155 = scalar_lea.vmem %s404, 48
        %v1156 = vld [vmem:[%s1155] sm:$0xff]
        %v1157 = vld [vmem:[%s1155 + $0x8] sm:$0xff]
        %v1158 = vld [vmem:[%s1155 + $0x10] sm:$0xff]
        %v1159 = vld [vmem:[%s1155 + $0x18] sm:$0xff]
        %v1160 = vld [vmem:[%s1155 + $0x20] sm:$0xff]
        %v1161 = vld [vmem:[%s1155 + $0x28] sm:$0xff]
        %v1162 = vsub.f32 %v1149, %v1156
        %v1163 = vsub.f32 %v1150, %v1157
        %v1164 = vsub.f32 %v1151, %v1158
        %v1165 = vsub.f32 %v1152, %v1159
        %v1166 = vsub.f32 %v1153, %v1160
        %v1167 = vsub.f32 %v1154, %v1161
        %v1168 = vand.u32 2147483647, %v1162
        %v1169 = vand.u32 2147483647, %v1163
        %v1170 = vand.u32 2147483647, %v1164
        %v1171 = vand.u32 2147483647, %v1165
        %v1172 = vand.u32 2147483647, %v1166
        %v1173 = vand.u32 2147483647, %v1167
        %1174 = vmatprep.subr.mxu0 0.0
        %1175 = vmatpush1.msra.mxu0 0.0
        %1176 = vmatprep.subr.mxu0 0.0
        %1177 = vmatpush1.msra.mxu0 0.0
        %1178 = vmatprep.subr.mxu0 0.0
        %1179 = vmatpush1.msra.mxu0 0.0
        %1180 = vmatprep.subr.mxu0 0.0
        %1181 = vmatpush1.msra.mxu0 0.0
        %1182 = vmatprep.subr.mxu0 0.0
        %1183 = vmatpush1.msra.mxu0 0.0
        %1184 = vmatprep.subr.mxu0 0.0
        %1185 = vmatpush1.msra.mxu0 0.0
        %1186 = vmatprep.subr.mxu0 0.0
        %1187 = vmatpush1.msra.mxu0 0.0
        %1188 = vmatprep.subr.mxu0 0.0
        %1189 = vmatpush1.msra.mxu0 0.0
        %1190 = vmatprep.subr.mxu0 0.0
        %1191 = vmatpush1.msra.mxu0 0.0
        %1192 = vmatprep.subr.mxu0 0.0
        %1193 = vmatpush1.msra.mxu0 0.0
        %1194 = vmatprep.subr.mxu0 0.0
        %1195 = vmatpush1.msra.mxu0 %v1173
        %1196 = vmatprep.subr.mxu0 0.0
        %1197 = vmatpush1.msra.mxu0 %v1172
        %1198 = vmatprep.subr.mxu0 0.0
        %1199 = vmatpush1.msra.mxu0 %v1171
        %1200 = vmatprep.subr.mxu0 0.0
        %1201 = vmatpush1.msra.mxu0 %v1170
        %1202 = vmatprep.subr.mxu0 0.0
        %1203 = vmatpush1.msra.mxu0 %v1169
        %1204 = vmatprep.subr.mxu0 0.0
        %1205 = vmatpush1.msra.mxu0 %v1168
        %1206 = vmatprep.subr.mxu0 0.0
        %1207 = vmatpush2.msra.mxu0 0.0
        %1208 = vmatprep.subr.mxu0 0.0
        %1209 = vmatpush2.msra.mxu0 0.0
        %1210 = vmatprep.subr.mxu0 0.0
        %1211 = vmatpush2.msra.mxu0 0.0
        %1212 = vmatprep.subr.mxu0 0.0
        %1213 = vmatpush2.msra.mxu0 0.0
        %1214 = vmatprep.subr.mxu0 0.0
        %1215 = vmatpush2.msra.mxu0 0.0
        %1216 = vmatprep.subr.mxu0 0.0
        %1217 = vmatpush2.msra.mxu0 0.0
        %1218 = vmatprep.subr.mxu0 0.0
        %1219 = vmatpush2.msra.mxu0 0.0
        %1220 = vmatprep.subr.mxu0 0.0
        %1221 = vmatpush2.msra.mxu0 0.0
        %1222 = vmatprep.subr.mxu0 0.0
        %1223 = vmatpush2.msra.mxu0 0.0
        %1224 = vmatprep.subr.mxu0 0.0
        %1225 = vmatpush2.msra.mxu0 0.0
        %1226 = vmatprep.subr.mxu0 0.0
        %1227 = vmatpush2.msra.mxu0 0.0
        %1228 = vmatprep.subr.mxu0 0.0
        %1229 = vmatpush2.msra.mxu0 0.0
        %1230 = vmatprep.subr.mxu0 0.0
        %1231 = vmatpush2.msra.mxu0 0.0
        %1232 = vmatprep.subr.mxu0 0.0
        %1233 = vmatpush2.msra.mxu0 0.0
        %1234 = vmatprep.subr.mxu0 0.0
        %1235 = vmatpush2.msra.mxu0 0.0
        %1236 = vmatprep.subr.mxu0 0.0
        %1237 = vmatpush2.msra.mxu0 0.0
        %1238 = vmatprep.mubr.f32.mxu0 0.0
        %1239 = vmatmul.mubr.f32.gmra.mxu0 %v469
        %v1240 = vpop.f32.mrf.mxu0
        %v1241 = vadd.f32 0.0, %v1240
        %v1242 = vpop.f32.mrf.mxu0
        %1243 = vmatprep.mubr.f32.mxu0 0.0
        %1244 = vmatmul.mubr.f32.gmra.mxu0 %v472
        %v1245 = vpop.f32.mrf.mxu0
        %v1246 = vadd.f32 0.0, %v1245
        %v1247 = vpop.f32.mrf.mxu0
        %1248 = vmatprep.mubr.f32.mxu0 0.0
        %1249 = vmatmul.mubr.f32.gmra.mxu0 %v475
        %v1250 = vpop.f32.mrf.mxu0
        %v1251 = vadd.f32 0.0, %v1250
        %v1252 = vpop.f32.mrf.mxu0
        %1253 = vmatprep.mubr.f32.mxu0 0.0
        %1254 = vmatmul.mubr.f32.gmra.mxu0 %v478
        %v1255 = vpop.f32.mrf.mxu0
        %v1256 = vadd.f32 0.0, %v1255
        %v1257 = vpop.f32.mrf.mxu0
        %1258 = vmatprep.mubr.f32.mxu0 0.0
        %1259 = vmatmul.mubr.f32.gmra.mxu0 %v481
        %v1260 = vpop.f32.mrf.mxu0
        %v1261 = vadd.f32 0.0, %v1260
        %v1262 = vpop.f32.mrf.mxu0
        %1263 = vmatprep.mubr.f32.mxu0 0.0
        %1264 = vmatmul.mubr.f32.gmra.mxu0 %v484
        %v1265 = vpop.f32.mrf.mxu0
        %v1266 = vadd.f32 0.0, %v1265
        %v1267 = vpop.f32.mrf.mxu0
        %1268 = vmatprep.mubr.f32.mxu0 0.0
        %1269 = vmatmul.mubr.f32.gmra.mxu0 %v487
        %v1270 = vpop.f32.mrf.mxu0
        %v1271 = vadd.f32 0.0, %v1270
        %v1272 = vpop.f32.mrf.mxu0
        %1273 = vmatprep.mubr.f32.mxu0 0.0
        %1274 = vmatmul.mubr.f32.gmra.mxu0 %v490
        %v1275 = vpop.f32.mrf.mxu0
        %v1276 = vadd.f32 0.0, %v1275
        %v1277 = vpop.f32.mrf.mxu0
        %1278 = vmatprep.mubr.f32.mxu0 0.0
        %1279 = vmatmul.mubr.f32.gmra.mxu0 %v493
        %v1280 = vpop.f32.mrf.mxu0
        %v1281 = vadd.f32 0.0, %v1280
        %v1282 = vpop.f32.mrf.mxu0
        %1283 = vdwg.mxu0
        %v1285 = vsel %vm605, %v1256, 0
        %v1288 = vsel %vm605, %v1261, 0
        %v1291 = vsel %vm605, %v1266, 0
        %1293 = vmatprep.subr.mxu0 0.0
        %1294 = vmatpush1.msra.mxu0 0.0
        %1295 = vmatprep.subr.mxu0 0.0
        %1296 = vmatpush1.msra.mxu0 0.0
        %1297 = vmatprep.subr.mxu0 0.0
        %1298 = vmatpush1.msra.mxu0 0.0
        %1299 = vmatprep.subr.mxu0 0.0
        %1300 = vmatpush1.msra.mxu0 0.0
        %1301 = vmatprep.subr.mxu0 0.0
        %1302 = vmatpush1.msra.mxu0 0.0
        %1303 = vmatprep.subr.mxu0 0.0
        %1304 = vmatpush1.msra.mxu0 0.0
        %1305 = vmatprep.subr.mxu0 0.0
        %1306 = vmatpush1.msra.mxu0 0.0
        %1307 = vmatprep.subr.mxu0 0.0
        %1308 = vmatpush1.msra.mxu0 0.0
        %1309 = vmatprep.subr.mxu0 0.0
        %1310 = vmatpush1.msra.mxu0 0.0
        %1311 = vmatprep.subr.mxu0 0.0
        %1312 = vmatpush1.msra.mxu0 0.0
        %1313 = vmatprep.subr.mxu0 0.0
        %1314 = vmatpush1.msra.mxu0 0.0
        %1315 = vmatprep.subr.mxu0 0.0
        %1316 = vmatpush1.msra.mxu0 0.0
        %1317 = vmatprep.subr.mxu0 0.0
        %1318 = vmatpush1.msra.mxu0 0.0
        %1319 = vmatprep.subr.mxu0 0.0
        %1320 = vmatpush1.msra.mxu0 0.0
        %1321 = vmatprep.subr.mxu0 0.0
        %1322 = vmatpush1.msra.mxu0 %v428
        %1323 = vmatprep.subr.mxu0 0.0
        %1324 = vmatpush1.msra.mxu0 %v427
        %1325 = vmatprep.subr.mxu0 0.0
        %1326 = vmatpush2.msra.mxu0 0.0
        %1327 = vmatprep.subr.mxu0 0.0
        %1328 = vmatpush2.msra.mxu0 0.0
        %1329 = vmatprep.subr.mxu0 0.0
        %1330 = vmatpush2.msra.mxu0 0.0
        %1331 = vmatprep.subr.mxu0 0.0
        %1332 = vmatpush2.msra.mxu0 0.0
        %1333 = vmatprep.subr.mxu0 0.0
        %1334 = vmatpush2.msra.mxu0 0.0
        %1335 = vmatprep.subr.mxu0 0.0
        %1336 = vmatpush2.msra.mxu0 0.0
        %1337 = vmatprep.subr.mxu0 0.0
        %1338 = vmatpush2.msra.mxu0 0.0
        %1339 = vmatprep.subr.mxu0 0.0
        %1340 = vmatpush2.msra.mxu0 0.0
        %1341 = vmatprep.subr.mxu0 0.0
        %1342 = vmatpush2.msra.mxu0 0.0
        %1343 = vmatprep.subr.mxu0 0.0
        %1344 = vmatpush2.msra.mxu0 0.0
        %1345 = vmatprep.subr.mxu0 0.0
        %1346 = vmatpush2.msra.mxu0 0.0
        %1347 = vmatprep.subr.mxu0 0.0
        %1348 = vmatpush2.msra.mxu0 0.0
        %1349 = vmatprep.subr.mxu0 0.0
        %1350 = vmatpush2.msra.mxu0 0.0
        %1351 = vmatprep.subr.mxu0 0.0
        %1352 = vmatpush2.msra.mxu0 0.0
        %1353 = vmatprep.subr.mxu0 0.0
        %1354 = vmatpush2.msra.mxu0 0.0
        %1355 = vmatprep.subr.mxu0 0.0
        %1356 = vmatpush2.msra.mxu0 0.0
        %1357 = vmatprep.mubr.f32.mxu0 0.0
        %1358 = vmatmul.mubr.f32.gmra.mxu0 %v1285
        %v1359 = vpop.f32.mrf.mxu0
        %v1360 = vadd.f32 0.0, %v1359
        %v1361 = vpop.f32.mrf.mxu0
        %1362 = vmatprep.mubr.f32.mxu0 0.0
        %1363 = vmatmul.mubr.f32.gmra.mxu0 %v1288
        %v1364 = vpop.f32.mrf.mxu0
        %v1365 = vadd.f32 0.0, %v1364
        %v1366 = vpop.f32.mrf.mxu0
        %1367 = vmatprep.mubr.f32.mxu0 0.0
        %1368 = vmatmul.mubr.f32.gmra.mxu0 %v1291
        %v1369 = vpop.f32.mrf.mxu0
        %v1370 = vadd.f32 0.0, %v1369
        %v1371 = vpop.f32.mrf.mxu0
        %1372 = vdwg.mxu0
        %v1374 = vsel %vm605, %v1241, 0
        %v1377 = vsel %vm605, %v1246, 0
        %v1380 = vsel %vm605, %v1251, 0
        %1382 = vmatprep.subr.mxu0 0.0
        %1383 = vmatpush1.msra.mxu0 0.0
        %1384 = vmatprep.subr.mxu0 0.0
        %1385 = vmatpush1.msra.mxu0 0.0
        %1386 = vmatprep.subr.mxu0 0.0
        %1387 = vmatpush1.msra.mxu0 0.0
        %1388 = vmatprep.subr.mxu0 0.0
        %1389 = vmatpush1.msra.mxu0 0.0
        %1390 = vmatprep.subr.mxu0 0.0
        %1391 = vmatpush1.msra.mxu0 0.0
        %1392 = vmatprep.subr.mxu0 0.0
        %1393 = vmatpush1.msra.mxu0 0.0
        %1394 = vmatprep.subr.mxu0 0.0
        %1395 = vmatpush1.msra.mxu0 0.0
        %1396 = vmatprep.subr.mxu0 0.0
        %1397 = vmatpush1.msra.mxu0 0.0
        %1398 = vmatprep.subr.mxu0 0.0
        %1399 = vmatpush1.msra.mxu0 0.0
        %1400 = vmatprep.subr.mxu0 0.0
        %1401 = vmatpush1.msra.mxu0 0.0
        %1402 = vmatprep.subr.mxu0 0.0
        %1403 = vmatpush1.msra.mxu0 0.0
        %1404 = vmatprep.subr.mxu0 0.0
        %1405 = vmatpush1.msra.mxu0 0.0
        %1406 = vmatprep.subr.mxu0 0.0
        %1407 = vmatpush1.msra.mxu0 0.0
        %1408 = vmatprep.subr.mxu0 0.0
        %1409 = vmatpush1.msra.mxu0 0.0
        %1410 = vmatprep.subr.mxu0 0.0
        %1411 = vmatpush1.msra.mxu0 %v425
        %1412 = vmatprep.subr.mxu0 0.0
        %1413 = vmatpush1.msra.mxu0 %v424
        %1414 = vmatprep.subr.mxu0 0.0
        %1415 = vmatpush2.msra.mxu0 0.0
        %1416 = vmatprep.subr.mxu0 0.0
        %1417 = vmatpush2.msra.mxu0 0.0
        %1418 = vmatprep.subr.mxu0 0.0
        %1419 = vmatpush2.msra.mxu0 0.0
        %1420 = vmatprep.subr.mxu0 0.0
        %1421 = vmatpush2.msra.mxu0 0.0
        %1422 = vmatprep.subr.mxu0 0.0
        %1423 = vmatpush2.msra.mxu0 0.0
        %1424 = vmatprep.subr.mxu0 0.0
        %1425 = vmatpush2.msra.mxu0 0.0
        %1426 = vmatprep.subr.mxu0 0.0
        %1427 = vmatpush2.msra.mxu0 0.0
        %1428 = vmatprep.subr.mxu0 0.0
        %1429 = vmatpush2.msra.mxu0 0.0
        %1430 = vmatprep.subr.mxu0 0.0
        %1431 = vmatpush2.msra.mxu0 0.0
        %1432 = vmatprep.subr.mxu0 0.0
        %1433 = vmatpush2.msra.mxu0 0.0
        %1434 = vmatprep.subr.mxu0 0.0
        %1435 = vmatpush2.msra.mxu0 0.0
        %1436 = vmatprep.subr.mxu0 0.0
        %1437 = vmatpush2.msra.mxu0 0.0
        %1438 = vmatprep.subr.mxu0 0.0
        %1439 = vmatpush2.msra.mxu0 0.0
        %1440 = vmatprep.subr.mxu0 0.0
        %1441 = vmatpush2.msra.mxu0 0.0
        %1442 = vmatprep.subr.mxu0 0.0
        %1443 = vmatpush2.msra.mxu0 0.0
        %1444 = vmatprep.subr.mxu0 0.0
        %1445 = vmatpush2.msra.mxu0 0.0
        %1446 = vmatprep.mubr.f32.mxu0 0.0
        %1447 = vmatmul.mubr.f32.gmra.mxu0 %v1374
        %v1448 = vpop.f32.mrf.mxu0
        %v1449 = vadd.f32 %v1360, %v1448
        %v1450 = vpop.f32.mrf.mxu0
        %1451 = vmatprep.mubr.f32.mxu0 0.0
        %1452 = vmatmul.mubr.f32.gmra.mxu0 %v1377
        %v1453 = vpop.f32.mrf.mxu0
        %v1454 = vadd.f32 %v1365, %v1453
        %v1455 = vpop.f32.mrf.mxu0
        %1456 = vmatprep.mubr.f32.mxu0 0.0
        %1457 = vmatmul.mubr.f32.gmra.mxu0 %v1380
        %v1458 = vpop.f32.mrf.mxu0
        %v1459 = vadd.f32 %v1370, %v1458
        %v1460 = vpop.f32.mrf.mxu0
        %1461 = vdwg.mxu0
        %v1463 = vsel %vm605, %v1271, 0
        %v1466 = vsel %vm605, %v1276, 0
        %v1469 = vsel %vm605, %v1281, 0
        %1471 = vmatprep.subr.mxu0 0.0
        %1472 = vmatpush1.msra.mxu0 0.0
        %1473 = vmatprep.subr.mxu0 0.0
        %1474 = vmatpush1.msra.mxu0 0.0
        %1475 = vmatprep.subr.mxu0 0.0
        %1476 = vmatpush1.msra.mxu0 0.0
        %1477 = vmatprep.subr.mxu0 0.0
        %1478 = vmatpush1.msra.mxu0 0.0
        %1479 = vmatprep.subr.mxu0 0.0
        %1480 = vmatpush1.msra.mxu0 0.0
        %1481 = vmatprep.subr.mxu0 0.0
        %1482 = vmatpush1.msra.mxu0 0.0
        %1483 = vmatprep.subr.mxu0 0.0
        %1484 = vmatpush1.msra.mxu0 0.0
        %1485 = vmatprep.subr.mxu0 0.0
        %1486 = vmatpush1.msra.mxu0 0.0
        %1487 = vmatprep.subr.mxu0 0.0
        %1488 = vmatpush1.msra.mxu0 0.0
        %1489 = vmatprep.subr.mxu0 0.0
        %1490 = vmatpush1.msra.mxu0 0.0
        %1491 = vmatprep.subr.mxu0 0.0
        %1492 = vmatpush1.msra.mxu0 0.0
        %1493 = vmatprep.subr.mxu0 0.0
        %1494 = vmatpush1.msra.mxu0 0.0
        %1495 = vmatprep.subr.mxu0 0.0
        %1496 = vmatpush1.msra.mxu0 0.0
        %1497 = vmatprep.subr.mxu0 0.0
        %1498 = vmatpush1.msra.mxu0 0.0
        %1499 = vmatprep.subr.mxu0 0.0
        %1500 = vmatpush1.msra.mxu0 %v431
        %1501 = vmatprep.subr.mxu0 0.0
        %1502 = vmatpush1.msra.mxu0 %v430
        %1503 = vmatprep.subr.mxu0 0.0
        %1504 = vmatpush2.msra.mxu0 0.0
        %1505 = vmatprep.subr.mxu0 0.0
        %1506 = vmatpush2.msra.mxu0 0.0
        %1507 = vmatprep.subr.mxu0 0.0
        %1508 = vmatpush2.msra.mxu0 0.0
        %1509 = vmatprep.subr.mxu0 0.0
        %1510 = vmatpush2.msra.mxu0 0.0
        %1511 = vmatprep.subr.mxu0 0.0
        %1512 = vmatpush2.msra.mxu0 0.0
        %1513 = vmatprep.subr.mxu0 0.0
        %1514 = vmatpush2.msra.mxu0 0.0
        %1515 = vmatprep.subr.mxu0 0.0
        %1516 = vmatpush2.msra.mxu0 0.0
        %1517 = vmatprep.subr.mxu0 0.0
        %1518 = vmatpush2.msra.mxu0 0.0
        %1519 = vmatprep.subr.mxu0 0.0
        %1520 = vmatpush2.msra.mxu0 0.0
        %1521 = vmatprep.subr.mxu0 0.0
        %1522 = vmatpush2.msra.mxu0 0.0
        %1523 = vmatprep.subr.mxu0 0.0
        %1524 = vmatpush2.msra.mxu0 0.0
        %1525 = vmatprep.subr.mxu0 0.0
        %1526 = vmatpush2.msra.mxu0 0.0
        %1527 = vmatprep.subr.mxu0 0.0
        %1528 = vmatpush2.msra.mxu0 0.0
        %1529 = vmatprep.subr.mxu0 0.0
        %1530 = vmatpush2.msra.mxu0 0.0
        %1531 = vmatprep.subr.mxu0 0.0
        %1532 = vmatpush2.msra.mxu0 0.0
        %1533 = vmatprep.subr.mxu0 0.0
        %1534 = vmatpush2.msra.mxu0 0.0
        %1535 = vmatprep.mubr.f32.mxu0 0.0
        %1536 = vmatmul.mubr.f32.gmra.mxu0 %v1463
        %v1537 = vpop.f32.mrf.mxu0
        %v1538 = vadd.f32 0.0, %v1537
        %v1539 = vpop.f32.mrf.mxu0
        %1540 = vmatprep.mubr.f32.mxu0 0.0
        %1541 = vmatmul.mubr.f32.gmra.mxu0 %v1466
        %v1542 = vpop.f32.mrf.mxu0
        %v1543 = vadd.f32 0.0, %v1542
        %v1544 = vpop.f32.mrf.mxu0
        %1545 = vmatprep.mubr.f32.mxu0 0.0
        %1546 = vmatmul.mubr.f32.gmra.mxu0 %v1469
        %v1547 = vpop.f32.mrf.mxu0
        %v1548 = vadd.f32 0.0, %v1547
        %v1549 = vpop.f32.mrf.mxu0
        %1550 = vdwg.mxu0
        %v1551 = vadd.f32 %v1449, %v1538
        %v1552 = vadd.f32 %v1454, %v1543
        %v1553 = vadd.f32 %v1459, %v1548
        %v1554 = vmax.f32 %v1551, 0.0
        %v1555 = vmax.f32 %v1552, 0.0
        %v1556 = vmax.f32 %v1553, 0.0
        %1557 = vmatprep.subr.mxu0 0.0
        %1558 = vmatpush1.msra.mxu0 0.0
        %1559 = vmatprep.subr.mxu0 0.0
        %1560 = vmatpush1.msra.mxu0 0.0
        %1561 = vmatprep.subr.mxu0 0.0
        %1562 = vmatpush1.msra.mxu0 0.0
        %1563 = vmatprep.subr.mxu0 0.0
        %1564 = vmatpush1.msra.mxu0 0.0
        %1565 = vmatprep.subr.mxu0 0.0
        %1566 = vmatpush1.msra.mxu0 0.0
        %1567 = vmatprep.subr.mxu0 0.0
        %1568 = vmatpush1.msra.mxu0 0.0
        %1569 = vmatprep.subr.mxu0 0.0
        %1570 = vmatpush1.msra.mxu0 0.0
        %1571 = vmatprep.subr.mxu0 0.0
        %1572 = vmatpush1.msra.mxu0 0.0
        %1573 = vmatprep.subr.mxu0 0.0
        %1574 = vmatpush1.msra.mxu0 0.0
        %1575 = vmatprep.subr.mxu0 0.0
        %1576 = vmatpush1.msra.mxu0 0.0
        %1577 = vmatprep.subr.mxu0 0.0
        %1578 = vmatpush1.msra.mxu0 0.0
        %1579 = vmatprep.subr.mxu0 0.0
        %1580 = vmatpush1.msra.mxu0 0.0
        %1581 = vmatprep.subr.mxu0 0.0
        %1582 = vmatpush1.msra.mxu0 0.0
        %1583 = vmatprep.subr.mxu0 0.0
        %1584 = vmatpush1.msra.mxu0 %v1556
        %1585 = vmatprep.subr.mxu0 0.0
        %1586 = vmatpush1.msra.mxu0 %v1555
        %1587 = vmatprep.subr.mxu0 0.0
        %1588 = vmatpush1.msra.mxu0 %v1554
        %1589 = vmatprep.subr.mxu0 0.0
        %1590 = vmatpush2.msra.mxu0 0.0
        %1591 = vmatprep.subr.mxu0 0.0
        %1592 = vmatpush2.msra.mxu0 0.0
        %1593 = vmatprep.subr.mxu0 0.0
        %1594 = vmatpush2.msra.mxu0 0.0
        %1595 = vmatprep.subr.mxu0 0.0
        %1596 = vmatpush2.msra.mxu0 0.0
        %1597 = vmatprep.subr.mxu0 0.0
        %1598 = vmatpush2.msra.mxu0 0.0
        %1599 = vmatprep.subr.mxu0 0.0
        %1600 = vmatpush2.msra.mxu0 0.0
        %1601 = vmatprep.subr.mxu0 0.0
        %1602 = vmatpush2.msra.mxu0 0.0
        %1603 = vmatprep.subr.mxu0 0.0
        %1604 = vmatpush2.msra.mxu0 0.0
        %1605 = vmatprep.subr.mxu0 0.0
        %1606 = vmatpush2.msra.mxu0 0.0
        %1607 = vmatprep.subr.mxu0 0.0
        %1608 = vmatpush2.msra.mxu0 0.0
        %1609 = vmatprep.subr.mxu0 0.0
        %1610 = vmatpush2.msra.mxu0 0.0
        %1611 = vmatprep.subr.mxu0 0.0
        %1612 = vmatpush2.msra.mxu0 0.0
        %1613 = vmatprep.subr.mxu0 0.0
        %1614 = vmatpush2.msra.mxu0 0.0
        %1615 = vmatprep.subr.mxu0 0.0
        %1616 = vmatpush2.msra.mxu0 0.0
        %1617 = vmatprep.subr.mxu0 0.0
        %1618 = vmatpush2.msra.mxu0 0.0
        %1619 = vmatprep.subr.mxu0 0.0
        %1620 = vmatpush2.msra.mxu0 0.0
        %1621 = vmatprep.mubr.f32.mxu0 0.0
        %1622 = vmatmul.mubr.f32.gmra.mxu0 %v881
        %v1623 = vpop.f32.mrf.mxu0
        %v1624 = vadd.f32 0.0, %v1623
        %v1625 = vpop.f32.mrf.mxu0
        %1626 = vdwg.mxu0
        %v1627 = vsub.f32 0.0, %v1624
        %v1628 = vmul.f32 %v1627, 1.442695
        %v1629 = vpow.pop %v1628
        %v1630 = vadd.f32 %v1629, 1.0
        %v1631 = vrcp.pop %v1630
        %v1632 = vmul.f32 1.0, %v1631
        %v1634 = vsel %vm959, %v1632, 0
        %1636 = vmatprep.subr.mxu0 0.0
        %1637 = vmatpush1.msra.mxu0 0.0
        %1638 = vmatprep.subr.mxu0 0.0
        %1639 = vmatpush1.msra.mxu0 0.0
        %1640 = vmatprep.subr.mxu0 0.0
        %1641 = vmatpush1.msra.mxu0 0.0
        %1642 = vmatprep.subr.mxu0 0.0
        %1643 = vmatpush1.msra.mxu0 0.0
        %1644 = vmatprep.subr.mxu0 0.0
        %1645 = vmatpush1.msra.mxu0 0.0
        %1646 = vmatprep.subr.mxu0 0.0
        %1647 = vmatpush1.msra.mxu0 0.0
        %1648 = vmatprep.subr.mxu0 0.0
        %1649 = vmatpush1.msra.mxu0 0.0
        %1650 = vmatprep.subr.mxu0 0.0
        %1651 = vmatpush1.msra.mxu0 0.0
        %1652 = vmatprep.subr.mxu0 0.0
        %1653 = vmatpush1.msra.mxu0 0.0
        %1654 = vmatprep.subr.mxu0 0.0
        %1655 = vmatpush1.msra.mxu0 0.0
        %1656 = vmatprep.subr.mxu0 0.0
        %1657 = vmatpush1.msra.mxu0 0.0
        %1658 = vmatprep.subr.mxu0 0.0
        %1659 = vmatpush1.msra.mxu0 0.0
        %1660 = vmatprep.subr.mxu0 0.0
        %1661 = vmatpush1.msra.mxu0 0.0
        %1662 = vmatprep.subr.mxu0 0.0
        %1663 = vmatpush1.msra.mxu0 0.0
        %1664 = vmatprep.subr.mxu0 0.0
        %1665 = vmatpush1.msra.mxu0 0.0
        %1666 = vmatprep.subr.mxu0 0.0
        %1667 = vmatpush1.msra.mxu0 %v433
        %1668 = vmatprep.subr.mxu0 0.0
        %1669 = vmatpush2.msra.mxu0 0.0
        %1670 = vmatprep.subr.mxu0 0.0
        %1671 = vmatpush2.msra.mxu0 0.0
        %1672 = vmatprep.subr.mxu0 0.0
        %1673 = vmatpush2.msra.mxu0 0.0
        %1674 = vmatprep.subr.mxu0 0.0
        %1675 = vmatpush2.msra.mxu0 0.0
        %1676 = vmatprep.subr.mxu0 0.0
        %1677 = vmatpush2.msra.mxu0 0.0
        %1678 = vmatprep.subr.mxu0 0.0
        %1679 = vmatpush2.msra.mxu0 0.0
        %1680 = vmatprep.subr.mxu0 0.0
        %1681 = vmatpush2.msra.mxu0 0.0
        %1682 = vmatprep.subr.mxu0 0.0
        %1683 = vmatpush2.msra.mxu0 0.0
        %1684 = vmatprep.subr.mxu0 0.0
        %1685 = vmatpush2.msra.mxu0 0.0
        %1686 = vmatprep.subr.mxu0 0.0
        %1687 = vmatpush2.msra.mxu0 0.0
        %1688 = vmatprep.subr.mxu0 0.0
        %1689 = vmatpush2.msra.mxu0 0.0
        %1690 = vmatprep.subr.mxu0 0.0
        %1691 = vmatpush2.msra.mxu0 0.0
        %1692 = vmatprep.subr.mxu0 0.0
        %1693 = vmatpush2.msra.mxu0 0.0
        %1694 = vmatprep.subr.mxu0 0.0
        %1695 = vmatpush2.msra.mxu0 0.0
        %1696 = vmatprep.subr.mxu0 0.0
        %1697 = vmatpush2.msra.mxu0 0.0
        %1698 = vmatprep.subr.mxu0 0.0
        %1699 = vmatpush2.msra.mxu0 0.0
        %1700 = vmatprep.mubr.f32.mxu0 0.0
        %1701 = vmatmul.mubr.f32.gmra.mxu0 %v1634
        %v1702 = vpop.f32.mrf.mxu0
        %v1703 = vadd.f32 0.0, %v1702
        %v1704 = vpop.f32.mrf.mxu0
        %1705 = vdwg.mxu0
        %v1706 = vmul.f32 %v1703, %v434
        %v1707 = vrot.slane %v1706, 4
        %v1708 = vadd.f32 %v1706, %v1707
        %v1709 = vrot.slane %v1708, 2
        %v1710 = vadd.f32 %v1708, %v1709
        %v1711 = vrot.slane %v1710, 1
        %v1712 = vadd.f32 %v1710, %v1711
        %s1713 = scalar_lea.vmem %s411, 32
        %v1714 = vld [vmem:[%s1713] sm:$0xff]
        %v1715 = vld [vmem:[%s1713 + $0x8] sm:$0xff]
        %v1716 = vld [vmem:[%s1713 + $0x10] sm:$0xff]
        %v1717 = vld [vmem:[%s1713 + $0x18] sm:$0xff]
        %v1718 = vpack.c.bf16 %v1715, %v1714
        %v1719 = vpack.c.bf16 %v1717, %v1716
        %1720 = vmatprep.subr.bf16.mxu0 0
        %1721 = vmatpush1.bf16.msra.mxu0 0
        %1722 = vmatprep.subr.bf16.mxu0 0
        %1723 = vmatpush1.bf16.msra.mxu0 0
        %1724 = vmatprep.subr.bf16.mxu0 0
        %1725 = vmatpush1.bf16.msra.mxu0 0
        %1726 = vmatprep.subr.bf16.mxu0 0
        %1727 = vmatpush1.bf16.msra.mxu0 0
        %1728 = vmatprep.subr.bf16.mxu0 0
        %1729 = vmatpush1.bf16.msra.mxu0 0
        %1730 = vmatprep.subr.bf16.mxu0 0
        %1731 = vmatpush1.bf16.msra.mxu0 0
        %1732 = vmatprep.subr.bf16.mxu0 0
        %1733 = vmatpush1.bf16.msra.mxu0 %v1719
        %1734 = vmatprep.subr.bf16.mxu0 0
        %1735 = vmatpush1.bf16.msra.mxu0 %v1718
        %1736 = vmatprep.subr.bf16.mxu0 0
        %1737 = vmatpush2.bf16.msra.mxu0 0
        %1738 = vmatprep.subr.bf16.mxu0 0
        %1739 = vmatpush2.bf16.msra.mxu0 0
        %1740 = vmatprep.subr.bf16.mxu0 0
        %1741 = vmatpush2.bf16.msra.mxu0 0
        %1742 = vmatprep.subr.bf16.mxu0 0
        %1743 = vmatpush2.bf16.msra.mxu0 0
        %1744 = vmatprep.subr.bf16.mxu0 0
        %1745 = vmatpush2.bf16.msra.mxu0 0
        %1746 = vmatprep.subr.bf16.mxu0 0
        %1747 = vmatpush2.bf16.msra.mxu0 0
        %1748 = vmatprep.subr.bf16.mxu0 0
        %1749 = vmatpush2.bf16.msra.mxu0 0
        %1750 = vmatprep.subr.bf16.mxu0 0
        %1751 = vmatpush2.bf16.msra.mxu0 0
        %1752 = vmatprep.mubr.bf16.mxu0 0
        %1753 = vmatmul.mubr.bf16.gmra.mxu0 %v1078
        %v1754 = vpop.f32.mrf.mxu0
        %v1755 = vadd.f32 %v1049, %v1754
        %v1756 = vpop.f32.mrf.mxu0
        %v1757 = vpop.f32.mrf.mxu0
        %v1758 = vadd.f32 %v1054, %v1757
        %v1759 = vpop.f32.mrf.mxu0
        %1760 = vmatprep.mubr.bf16.mxu0 0
        %1761 = vmatmul.mubr.bf16.gmra.mxu0 %v1081
        %v1762 = vpop.f32.mrf.mxu0
        %v1763 = vadd.f32 %v1059, %v1762
        %v1764 = vpop.f32.mrf.mxu0
        %v1765 = vpop.f32.mrf.mxu0
        %v1766 = vadd.f32 %v1064, %v1765
        %v1767 = vpop.f32.mrf.mxu0
        %1768 = vdwg.mxu0
        %v1769 = vmax.f32 %v1755, 0.0
        %v1770 = vmax.f32 %v1758, 0.0
        %v1771 = vmax.f32 %v1763, 0.0
        %v1772 = vmax.f32 %v1766, 0.0
        %v1773 = vmul.f32 %v1712, %v1769
        %v1774 = vmul.f32 %v1712, %v1770
        %v1775 = vmul.f32 %v1712, %v1771
        %v1776 = vmul.f32 %v1712, %v1772
        %v1777 = vadd.f32 %v1773, %v1714
        %v1778 = vadd.f32 %v1774, %v1715
        %v1779 = vadd.f32 %v1775, %v1716
        %v1780 = vadd.f32 %v1776, %v1717
        %s1781 = scalar_lea.vmem %s391, 32 [#allocation2]
        %1782 = vst [vmem:[%s1781] sm:$0xff] %v1777
        %1783 = vst [vmem:[%s1781 + $0x8] sm:$0xff] %v1778
        %1784 = vst [vmem:[%s1781 + $0x10] sm:$0xff] %v1779
        %1785 = vst [vmem:[%s1781 + $0x18] sm:$0xff] %v1780
        %s1786 = sand.u32 %s257, 1
        %s1787 = scalar_lea.sflag [#allocation3], %s1786
        %s1788 = sand.u32 %s257, 1
        %s1789 = smul.addr %s1788, 64
        %s1790 = scalar_lea.vmem [#allocation2], %s1789
        // Predicated region
        $region61: #{tpu_custom_call.1} parent=59 // pred_check
          %p1791 = pneg %p267
        $region62: #{tpu_custom_call.1} parent=59 // pred_check_branch
          %1793 = sbr.rel (%p1791) target = $region64
        $region63: #{tpu_custom_call.1} parent=59 // pred_region
          %s1794 = smul.u32 2, %s24
          %s1796 = ssub.s32 1024, 1024
          %1797 = vsyncadd %s1787, %s1796
          %s1798 = smul.addr %s1794, 4
          %s1799 = smul.addr %s1798, 128
          %s1800 = scalar_lea.hbm %s10, %s1799
          %s1801 = sshll.u32 %s1790, 4
          %s1802 = int_to_ptr.vmem [resolvable:$true] %s1801
          %1807 = dma.vmem_to_hbm [thread:$0]  %s1802, 1024, %s1800, %s1787, 128, 128, 8
        $region64: #{tpu_custom_call.1} parent=59 // pred_fallthru
          _
      $region60: #{tpu_custom_call.1} parent=5 // pred_fallthru
        _
      %p1808 = scmp.le.s32.totalorder 2, %s19
      // Predicated region
      $region65: #{tpu_custom_call.1} parent=5 // pred_check
        %p1809 = pneg %p1808
      $region66: #{tpu_custom_call.1} parent=5 // pred_check_branch
        %1811 = sbr.rel (%p1809) target = $region68
      $region67: #{tpu_custom_call.1} parent=5 // pred_region
        %s1812 = ssub.s32 %s19, 2
        // Predicated region
        $region69: #{tpu_custom_call.1} parent=67 // pred_check
          %p1813 = pneg %p273
        $region70: #{tpu_custom_call.1} parent=67 // pred_check_branch
          %1815 = sbr.rel (%p1813) target = $region72
        $region71: #{tpu_custom_call.1} parent=67 // pred_region
          %s1816 = sand.u32 %s258, 1
          %s1817 = scalar_lea.sflag [#allocation3], %s1816
          %s1818 = sand.u32 %s258, 1
          %s1819 = smul.addr %s1818, 64
          %s1820 = scalar_lea.vmem [#allocation2], %s1819
          %1821 = dma.done %s1817, 1024
        $region72: #{tpu_custom_call.1} parent=67 // pred_fallthru
          _
      $region68: #{tpu_custom_call.1} parent=5 // pred_fallthru
        _
    $region6: #{tpu_custom_call.1} parent=1 // loop_footer
      %s23 = sadd.s32 1, %s19
    $region7: #{tpu_custom_call.1} parent=1 // loop_footer_branch
      %18 = sbr.rel target = $region3
    $region8: #{tpu_custom_call.1} parent=1 // loop_exit
      _
    %1822 = vsyncpa [#allocation3], 1
    %s1823 = scalar_lea.sflag [#allocation3], 1
    %1824 = vsyncpa %s1823, 1

</llo_original>
